<compile_context>
chip_gen: v6e
topology: v6e:2x2x1
jax: 0.10.0
libtpu: 0.0.40
codegen_flags: <defaults>
</compile_context>

<pallas_src>
import functools

import jax
import jax.numpy as jnp
from jax.experimental import pallas as pl
from jax.experimental.pallas import tpu as pltpu


def _lstm_recurrence_kernel(x_ref, wih_ref, whh_ref, b_ref, h0_ref, c0_ref,
                            hs_ref, gx_ref, *, T, B_pad, Hp):
    """LSTM recurrence over T steps, single invocation.

    x_ref   : (T*B_pad, E)    time-major inputs, bf16 (row = t*B_pad + b)
    wih_ref : (E, 4*Hp)       input->gate weights, pre-transposed, per-gate padded, bf16
    whh_ref : (Hp, 4*Hp)      hidden->gate weights, same layout, bf16
    b_ref   : (1, 4*Hp)       b_ih + b_hh, per-gate padded, f32
    h0_ref  : (B_pad, Hp)     initial hidden state, f32
    c0_ref  : (B_pad, Hp)     initial cell state, f32
    hs_ref  : (T*B_pad, Hp)   OUT: time-major hidden states, f32
    gx_ref  : (T*B_pad, 4*Hp) scratch: hoisted input projection, f32
    """
    # Hoisted input projection: one (T*B_pad,E)@(E,4Hp) bf16 MXU GEMM (f32 accum)
    # + bias broadcast once, written to VMEM scratch so the unrolled recurrence
    # does not hold it live in vregs.
    gx_ref[...] = (jnp.dot(x_ref[...], wih_ref[...],
                           preferred_element_type=jnp.float32)
                   + b_ref[...])

    w_hh = whh_ref[...]                        # (Hp, 4Hp) bf16, resident
    h = h0_ref[...]                            # (B_pad, Hp) f32 carry
    c = c0_ref[...]

    # Sequential recurrence. T is small & static here, so a Python unroll with
    # static full-tile slices is safe; only h/c are loop-carried values, the
    # gates and hidden states stream through refs (bounded vreg pressure).
    for t in range(T):
        r0 = t * B_pad                                          # sublane-aligned
        gates = (gx_ref[r0:r0 + B_pad, :]
                 + jnp.dot(h.astype(jnp.bfloat16), w_hh,
                           preferred_element_type=jnp.float32))
        # PyTorch gate order i, f, g, o; each slice is a full lane-tile view
        # because Hp is a multiple of 128 (per-gate padded weights).
        i = jax.nn.sigmoid(gates[:, 0 * Hp:1 * Hp])
        f = jax.nn.sigmoid(gates[:, 1 * Hp:2 * Hp])
        g = jnp.tanh(gates[:, 2 * Hp:3 * Hp])
        o = jax.nn.sigmoid(gates[:, 3 * Hp:4 * Hp])
        c = f * c + i * g
        h = o * jnp.tanh(c)
        hs_ref[r0:r0 + B_pad, :] = h                            # full-tile store


def _vocab_proj_kernel(hs_ref, wlin_ref, blin_ref, out_ref):
    """One Vp tile of the vocab projection: (B*T, Hp) @ (Hp, TILE_V) + bias."""
    out_ref[...] = (jnp.dot(hs_ref[...], wlin_ref[...],
                            preferred_element_type=jnp.float32)
                    + blin_ref[...])


def _vmem_limit_bytes(nbytes):
    """2x headroom + 2 MiB, floor 16 MiB, capped at v7x physical VMEM."""
    return int(min(max(2 * nbytes + (2 << 20), 16 << 20), 64 << 20))


def _pad_gate_cols(w, H, Hp):
    """(rows, 4H) -> (rows, 4Hp): zero-pad each i/f/g/o column block to Hp lanes."""
    return jnp.concatenate(
        [jnp.pad(w[:, g * H:(g + 1) * H], ((0, 0), (0, Hp - H)))
         for g in range(4)], axis=1)


def decoder_rnn_forward(features, captions, params):
    """Mirror of DecoderRNN.forward. Returns (B, T, V), T = captions.shape[1]."""
    emb_table = params["embedding"]                      # (V, E)
    w_ih, b_ih = params["w_ih"], params["b_ih"]          # (4H, E), (4H,)
    w_hh, b_hh = params["w_hh"], params["b_hh"]          # (4H, H), (4H,)
    w_lin, b_lin = params["w_lin"], params["b_lin"]      # (V, H), (V,)

    B, E = features.shape
    H = w_hh.shape[1]
    V = w_lin.shape[0]

    # Padded sizes: sublane-aligned batch, lane-aligned hidden, tiled vocab.
    B_pad = 8 * pl.cdiv(B, 8)
    Hp = 128 * pl.cdiv(H, 128)
    TILE_V = 2048 if V >= 2048 else 128 * pl.cdiv(V, 128)
    Vp = TILE_V * pl.cdiv(V, TILE_V)

    # captions[:, :-1].transpose(0,1) -> (L-1, B); embedding gather (glue).
    cap_t = captions[:, :-1].T                           # (L-1, B)
    embeddings = jnp.take(emb_table, cap_t, axis=0)      # (L-1, B, E)
    inputs = jnp.concatenate(
        [features[None].astype(emb_table.dtype), embeddings], axis=0)   # (T,B,E)
    T = inputs.shape[0]
    inputs = jnp.pad(inputs.astype(jnp.float32), ((0, 0), (0, B_pad - B), (0, 0)))
    x_flat = inputs.reshape(T * B_pad, E).astype(jnp.bfloat16)

    # Weight prep (glue): pre-transpose, per-gate pad H->Hp, bf16 MXU operands.
    w_ih_t = _pad_gate_cols(w_ih.T.astype(jnp.float32), H, Hp).astype(jnp.bfloat16)
    w_hh_t = jnp.pad(_pad_gate_cols(w_hh.T.astype(jnp.float32), H, Hp),
                     ((0, Hp - H), (0, 0))).astype(jnp.bfloat16)
    b_gates = _pad_gate_cols((b_ih + b_hh).reshape(1, 4 * H).astype(jnp.float32),
                             H, Hp)                                       # (1,4Hp) f32
    h0 = jnp.pad(params["h0"].astype(jnp.float32), ((0, B_pad - B), (0, Hp - H)))
    c0 = jnp.pad(params["c0"].astype(jnp.float32), ((0, B_pad - B), (0, Hp - H)))
    w_lin_t = jnp.pad(w_lin.T.astype(jnp.float32),
                      ((0, Hp - H), (0, Vp - V))).astype(jnp.bfloat16)    # (Hp, Vp)
    b_lin_p = jnp.pad(b_lin.astype(jnp.float32), (0, Vp - V)).reshape(1, Vp)

    # ---- kernel 1: LSTM recurrence (tiny operands, fully VMEM-resident) ------
    vmem = pl.BlockSpec(memory_space=pltpu.MemorySpace.VMEM)
    k1_bytes = (x_flat.size * 2 + w_ih_t.size * 2 + w_hh_t.size * 2
                + b_gates.size * 4 + h0.size * 4 + c0.size * 4
                + T * B_pad * Hp * 4            # hidden-state output (f32)
                + T * B_pad * 4 * Hp * 4)       # gates_x scratch (f32)
    hs_tm = pl.pallas_call(
        functools.partial(_lstm_recurrence_kernel, T=T, B_pad=B_pad, Hp=Hp),
        out_shape=jax.ShapeDtypeStruct((T * B_pad, Hp), jnp.float32),
        in_specs=[vmem] * 6,
        out_specs=vmem,
        scratch_shapes=[pltpu.VMEM((T * B_pad, 4 * Hp), jnp.float32)],
        compiler_params=pltpu.CompilerParams(
            vmem_limit_bytes=_vmem_limit_bytes(k1_bytes)),
        cost_estimate=pl.CostEstimate(
            flops=int(2 * T * B_pad * E * 4 * Hp + 2 * T * B_pad * Hp * 4 * Hp),
            transcendentals=int(5 * T * B_pad * Hp),
            bytes_accessed=int(k1_bytes)),
    )(x_flat, w_ih_t, w_hh_t, b_gates, h0, c0)

    # Batch-major reorder of the SMALL (T*B_pad, Hp) hidden-state matrix (glue,
    # ~tens of KB) -- replaces the old B*T single-row concatenate and keeps the
    # permutation off the (B*T, Vp) logits. Cast to bf16 for the vocab GEMM.
    rows = B_pad * T
    hs_bt = (hs_tm.reshape(T, B_pad, Hp).transpose(1, 0, 2)
             .reshape(rows, Hp).astype(jnp.bfloat16))            # row = b*T + t

    # ---- kernel 2: vocab projection, tiled & parallel over Vp ----------------
    num_v_tiles = Vp // TILE_V
    k2_tile_bytes = (rows * Hp * 2
                     + 2 * (Hp * TILE_V * 2 + TILE_V * 4 + rows * TILE_V * 4))
    out_bt = pl.pallas_call(
        _vocab_proj_kernel,
        out_shape=jax.ShapeDtypeStruct((rows, Vp), jnp.float32),
        grid=(num_v_tiles,),
        in_specs=[pl.BlockSpec((rows, Hp), lambda j: (0, 0)),      # hs: resident
                  pl.BlockSpec((Hp, TILE_V), lambda j: (0, j)),    # W_lin^T tile
                  pl.BlockSpec((1, TILE_V), lambda j: (0, j))],    # bias tile
        out_specs=pl.BlockSpec((rows, TILE_V), lambda j: (0, j)),  # lane-dense
        compiler_params=pltpu.CompilerParams(
            dimension_semantics=("parallel",),
            vmem_limit_bytes=_vmem_limit_bytes(k2_tile_bytes)),
        cost_estimate=pl.CostEstimate(
            flops=int(2 * rows * Hp * Vp),
            transcendentals=0,
            bytes_accessed=int(rows * Hp * 2 + Hp * Vp * 2 + Vp * 4
                               + rows * Vp * 4)),
    )(hs_bt, w_lin_t, b_lin_p)

    # Contiguous reshape + pad-slice only; the permute(1,0,2) already happened on
    # the small hidden-state matrix above.
    out = out_bt.reshape(B_pad, T, Vp)[:B, :, :V]
    return out                                  # (B, T, V) == outputs.permute(1,0,2)


def decoder_rnn_reference(features, captions, params):
    """Pure-JAX f32 reference (lax.scan LSTM) for correctness checking."""
    emb_table = params["embedding"]
    w_ih, b_ih = params["w_ih"], params["b_ih"]
    w_hh, b_hh = params["w_hh"], params["b_hh"]
    w_lin, b_lin = params["w_lin"], params["b_lin"]
    h0, c0 = params["h0"], params["c0"]
    H = w_hh.shape[1]

    cap_t = captions[:, :-1].T
    embeddings = jnp.take(emb_table, cap_t, axis=0)
    inputs = jnp.concatenate([features[None], embeddings], axis=0)

    def step(carry, x):
        h, c = carry
        gates = x @ w_ih.T + b_ih + h @ w_hh.T + b_hh
        i = jax.nn.sigmoid(gates[:, 0:H])
        f = jax.nn.sigmoid(gates[:, H:2 * H])
        g = jnp.tanh(gates[:, 2 * H:3 * H])
        o = jax.nn.sigmoid(gates[:, 3 * H:4 * H])
        c_new = f * c + i * g
        h_new = o * jnp.tanh(c_new)
        return (h_new, c_new), h_new

    _, hs = jax.lax.scan(step, (h0, c0), inputs)
    out = hs @ w_lin.T + b_lin
    return out.transpose(1, 0, 2)


if __name__ == "__main__":
    # Small shapes consistent with the module.
    batch_size = 2
    embed_size = 32
    hidden_size = 32
    vocab_size = 64
    cap_len = 8          # -> T = 1 (features) + (cap_len - 1) = 8

    key = jax.random.PRNGKey(0)
    keys = jax.random.split(key, 12)

    params = {
        "embedding": 0.1 * jax.random.normal(keys[0], (vocab_size, embed_size), jnp.float32),
        "w_ih": 0.1 * jax.random.normal(keys[1], (4 * hidden_size, embed_size), jnp.float32),
        "w_hh": 0.1 * jax.random.normal(keys[2], (4 * hidden_size, hidden_size), jnp.float32),
        "b_ih": 0.1 * jax.random.normal(keys[3], (4 * hidden_size,), jnp.float32),
        "b_hh": 0.1 * jax.random.normal(keys[4], (4 * hidden_size,), jnp.float32),
        "w_lin": 0.1 * jax.random.normal(keys[5], (vocab_size, hidden_size), jnp.float32),
        "b_lin": 0.1 * jax.random.normal(keys[6], (vocab_size,), jnp.float32),
        # init_hidden uses torch.randn at forward time; here: deterministic keys.
        "h0": jax.random.normal(keys[7], (batch_size, hidden_size), jnp.float32),
        "c0": jax.random.normal(keys[8], (batch_size, hidden_size), jnp.float32),
    }

    features = jax.random.normal(keys[9], (batch_size, embed_size), jnp.float32)
    captions = jax.random.randint(keys[10], (batch_size, cap_len), 0, vocab_size,
                                  dtype=jnp.int32)

    out = decoder_rnn_forward(features, captions, params)
    out = jax.block_until_ready(out)

    ref = decoder_rnn_reference(features, captions, params)
    assert out.shape == (batch_size, cap_len, vocab_size), out.shape
    # bf16 MXU operands (f32 accumulation) vs the all-f32 reference -> loosened tol.
    assert jnp.allclose(out, ref, atol=5e-2, rtol=5e-2), "mismatch vs JAX reference"

    print("KERNEL_OK")
</pallas_src>

<mosaic_0001>
module attributes {stable_mosaic.version = 11 : i64} {
  func.func @_lstm_recurrence_kernel(%arg0: memref<64x32xbf16, #tpu.memory_space<vmem>>, %arg1: memref<32x512xbf16, #tpu.memory_space<vmem>>, %arg2: memref<128x512xbf16, #tpu.memory_space<vmem>>, %arg3: memref<1x512xf32, #tpu.memory_space<vmem>>, %arg4: memref<8x128xf32, #tpu.memory_space<vmem>>, %arg5: memref<8x128xf32, #tpu.memory_space<vmem>>, %arg6: memref<64x128xf32, #tpu.memory_space<vmem>>, %arg7: memref<64x512xf32, #tpu.memory_space<vmem>>) attributes {dimension_semantics = [], scalar_prefetch = 0 : i64, scratch_operands = 1 : i64, tpu.core_type = #tpu.core_type<tc>} {
    %c0 = arith.constant 0 : index
    %c0_0 = arith.constant 0 : index
    %0 = vector.load %arg0[%c0, %c0_0] : memref<64x32xbf16, #tpu.memory_space<vmem>>, vector<64x32xbf16>
    %c0_1 = arith.constant 0 : index
    %c0_2 = arith.constant 0 : index
    %1 = vector.load %arg1[%c0_1, %c0_2] : memref<32x512xbf16, #tpu.memory_space<vmem>>, vector<32x512xbf16>
    %cst = arith.constant dense<0.000000e+00> : vector<64x512xf32>
    %2 = tpu.matmul %0, %1, %cst {dimension_numbers = #tpu.dot_dimension_numbers<[1], [0], [0], [1], [0, 0, 1, 1], [], []>} : vector<64x32xbf16>, vector<32x512xbf16>, vector<64x512xf32> -> vector<64x512xf32>
    %c0_3 = arith.constant 0 : index
    %c0_4 = arith.constant 0 : index
    %3 = vector.load %arg3[%c0_3, %c0_4] : memref<1x512xf32, #tpu.memory_space<vmem>>, vector<1x512xf32>
    %4 = vector.broadcast %3 : vector<1x512xf32> to vector<64x512xf32>
    %5 = arith.addf %2, %4 : vector<64x512xf32>
    %c0_5 = arith.constant 0 : index
    %c0_6 = arith.constant 0 : index
    %6 = vector.load %arg7[%c0_5, %c0_6] : memref<64x512xf32, #tpu.memory_space<vmem>>, vector<64x512xf32>
    tpu.vector_store %arg7[%c0_5, %c0_6], %5 {strides = array<i32>} : memref<64x512xf32, #tpu.memory_space<vmem>>, vector<64x512xf32>,
    %c0_7 = arith.constant 0 : index
    %c0_8 = arith.constant 0 : index
    %7 = vector.load %arg2[%c0_7, %c0_8] : memref<128x512xbf16, #tpu.memory_space<vmem>>, vector<128x512xbf16>
    %c0_9 = arith.constant 0 : index
    %c0_10 = arith.constant 0 : index
    %8 = vector.load %arg4[%c0_9, %c0_10] : memref<8x128xf32, #tpu.memory_space<vmem>>, vector<8x128xf32>
    %c0_11 = arith.constant 0 : index
    %c0_12 = arith.constant 0 : index
    %9 = vector.load %arg5[%c0_11, %c0_12] : memref<8x128xf32, #tpu.memory_space<vmem>>, vector<8x128xf32>
    %c0_13 = arith.constant 0 : index
    %c0_14 = arith.constant 0 : index
    %10 = vector.load %arg7[%c0_13, %c0_14] : memref<64x512xf32, #tpu.memory_space<vmem>>, vector<8x512xf32>
    %11 = arith.truncf %8 : vector<8x128xf32> to vector<8x128xbf16>
    %cst_15 = arith.constant dense<0.000000e+00> : vector<8x512xf32>
    %12 = tpu.matmul %11, %7, %cst_15 {dimension_numbers = #tpu.dot_dimension_numbers<[1], [0], [0], [1], [0, 0, 1, 1], [], []>} : vector<8x128xbf16>, vector<128x512xbf16>, vector<8x512xf32> -> vector<8x512xf32>
    %13 = arith.addf %10, %12 : vector<8x512xf32>
    %14 = vector.extract_strided_slice %13 {offsets = [0, 0], sizes = [8, 128], strides = [1, 1]} : vector<8x512xf32> to vector<8x128xf32>
    %15 = arith.negf %14 : vector<8x128xf32>
    %16 = math.exp %15 : vector<8x128xf32>
    %cst_16 = arith.constant 1.000000e+00 : f32
    %17 = vector.broadcast %cst_16 : f32 to vector<8x128xf32>
    %18 = arith.addf %17, %16 : vector<8x128xf32>
    %19 = arith.divf %17, %18 : vector<8x128xf32>
    %20 = vector.extract_strided_slice %13 {offsets = [0, 128], sizes = [8, 128], strides = [1, 1]} : vector<8x512xf32> to vector<8x128xf32>
    %21 = arith.negf %20 : vector<8x128xf32>
    %22 = math.exp %21 : vector<8x128xf32>
    %cst_17 = arith.constant 1.000000e+00 : f32
    %23 = vector.broadcast %cst_17 : f32 to vector<8x128xf32>
    %24 = arith.addf %23, %22 : vector<8x128xf32>
    %25 = arith.divf %23, %24 : vector<8x128xf32>
    %26 = vector.extract_strided_slice %13 {offsets = [0, 256], sizes = [8, 128], strides = [1, 1]} : vector<8x512xf32> to vector<8x128xf32>
    %27 = math.tanh %26 : vector<8x128xf32>
    %28 = vector.extract_strided_slice %13 {offsets = [0, 384], sizes = [8, 128], strides = [1, 1]} : vector<8x512xf32> to vector<8x128xf32>
    %29 = arith.negf %28 : vector<8x128xf32>
    %30 = math.exp %29 : vector<8x128xf32>
    %cst_18 = arith.constant 1.000000e+00 : f32
    %31 = vector.broadcast %cst_18 : f32 to vector<8x128xf32>
    %32 = arith.addf %31, %30 : vector<8x128xf32>
    %33 = arith.divf %31, %32 : vector<8x128xf32>
    %34 = arith.mulf %25, %9 : vector<8x128xf32>
    %35 = arith.mulf %19, %27 : vector<8x128xf32>
    %36 = arith.addf %34, %35 : vector<8x128xf32>
    %37 = math.tanh %36 : vector<8x128xf32>
    %38 = arith.mulf %33, %37 : vector<8x128xf32>
    %c0_19 = arith.constant 0 : index
    %c0_20 = arith.constant 0 : index
    %39 = vector.load %arg6[%c0_19, %c0_20] : memref<64x128xf32, #tpu.memory_space<vmem>>, vector<8x128xf32>
    tpu.vector_store %arg6[%c0_19, %c0_20], %38 {strides = array<i32>} : memref<64x128xf32, #tpu.memory_space<vmem>>, vector<8x128xf32>,
    %c8 = arith.constant 8 : index
    %c0_21 = arith.constant 0 : index
    %40 = vector.load %arg7[%c8, %c0_21] : memref<64x512xf32, #tpu.memory_space<vmem>>, vector<8x512xf32>
    %41 = arith.truncf %38 : vector<8x128xf32> to vector<8x128xbf16>
    %cst_22 = arith.constant dense<0.000000e+00> : vector<8x512xf32>
    %42 = tpu.matmul %41, %7, %cst_22 {dimension_numbers = #tpu.dot_dimension_numbers<[1], [0], [0], [1], [0, 0, 1, 1], [], []>} : vector<8x128xbf16>, vector<128x512xbf16>, vector<8x512xf32> -> vector<8x512xf32>
    %43 = arith.addf %40, %42 : vector<8x512xf32>
    %44 = vector.extract_strided_slice %43 {offsets = [0, 0], sizes = [8, 128], strides = [1, 1]} : vector<8x512xf32> to vector<8x128xf32>
    %45 = arith.negf %44 : vector<8x128xf32>
    %46 = math.exp %45 : vector<8x128xf32>
    %cst_23 = arith.constant 1.000000e+00 : f32
    %47 = vector.broadcast %cst_23 : f32 to vector<8x128xf32>
    %48 = arith.addf %47, %46 : vector<8x128xf32>
    %49 = arith.divf %47, %48 : vector<8x128xf32>
    %50 = vector.extract_strided_slice %43 {offsets = [0, 128], sizes = [8, 128], strides = [1, 1]} : vector<8x512xf32> to vector<8x128xf32>
    %51 = arith.negf %50 : vector<8x128xf32>
    %52 = math.exp %51 : vector<8x128xf32>
    %cst_24 = arith.constant 1.000000e+00 : f32
    %53 = vector.broadcast %cst_24 : f32 to vector<8x128xf32>
    %54 = arith.addf %53, %52 : vector<8x128xf32>
    %55 = arith.divf %53, %54 : vector<8x128xf32>
    %56 = vector.extract_strided_slice %43 {offsets = [0, 256], sizes = [8, 128], strides = [1, 1]} : vector<8x512xf32> to vector<8x128xf32>
    %57 = math.tanh %56 : vector<8x128xf32>
    %58 = vector.extract_strided_slice %43 {offsets = [0, 384], sizes = [8, 128], strides = [1, 1]} : vector<8x512xf32> to vector<8x128xf32>
    %59 = arith.negf %58 : vector<8x128xf32>
    %60 = math.exp %59 : vector<8x128xf32>
    %cst_25 = arith.constant 1.000000e+00 : f32
    %61 = vector.broadcast %cst_25 : f32 to vector<8x128xf32>
    %62 = arith.addf %61, %60 : vector<8x128xf32>
    %63 = arith.divf %61, %62 : vector<8x128xf32>
    %64 = arith.mulf %55, %36 : vector<8x128xf32>
    %65 = arith.mulf %49, %57 : vector<8x128xf32>
    %66 = arith.addf %64, %65 : vector<8x128xf32>
    %67 = math.tanh %66 : vector<8x128xf32>
    %68 = arith.mulf %63, %67 : vector<8x128xf32>
    %c8_26 = arith.constant 8 : index
    %c0_27 = arith.constant 0 : index
    %69 = vector.load %arg6[%c8_26, %c0_27] : memref<64x128xf32, #tpu.memory_space<vmem>>, vector<8x128xf32>
    tpu.vector_store %arg6[%c8_26, %c0_27], %68 {strides = array<i32>} : memref<64x128xf32, #tpu.memory_space<vmem>>, vector<8x128xf32>,
    %c16 = arith.constant 16 : index
    %c0_28 = arith.constant 0 : index
    %70 = vector.load %arg7[%c16, %c0_28] : memref<64x512xf32, #tpu.memory_space<vmem>>, vector<8x512xf32>
    %71 = arith.truncf %68 : vector<8x128xf32> to vector<8x128xbf16>
    %cst_29 = arith.constant dense<0.000000e+00> : vector<8x512xf32>
    %72 = tpu.matmul %71, %7, %cst_29 {dimension_numbers = #tpu.dot_dimension_numbers<[1], [0], [0], [1], [0, 0, 1, 1], [], []>} : vector<8x128xbf16>, vector<128x512xbf16>, vector<8x512xf32> -> vector<8x512xf32>
    %73 = arith.addf %70, %72 : vector<8x512xf32>
    %74 = vector.extract_strided_slice %73 {offsets = [0, 0], sizes = [8, 128], strides = [1, 1]} : vector<8x512xf32> to vector<8x128xf32>
    %75 = arith.negf %74 : vector<8x128xf32>
    %76 = math.exp %75 : vector<8x128xf32>
    %cst_30 = arith.constant 1.000000e+00 : f32
    %77 = vector.broadcast %cst_30 : f32 to vector<8x128xf32>
    %78 = arith.addf %77, %76 : vector<8x128xf32>
    %79 = arith.divf %77, %78 : vector<8x128xf32>
    %80 = vector.extract_strided_slice %73 {offsets = [0, 128], sizes = [8, 128], strides = [1, 1]} : vector<8x512xf32> to vector<8x128xf32>
    %81 = arith.negf %80 : vector<8x128xf32>
    %82 = math.exp %81 : vector<8x128xf32>
    %cst_31 = arith.constant 1.000000e+00 : f32
    %83 = vector.broadcast %cst_31 : f32 to vector<8x128xf32>
    %84 = arith.addf %83, %82 : vector<8x128xf32>
    %85 = arith.divf %83, %84 : vector<8x128xf32>
    %86 = vector.extract_strided_slice %73 {offsets = [0, 256], sizes = [8, 128], strides = [1, 1]} : vector<8x512xf32> to vector<8x128xf32>
    %87 = math.tanh %86 : vector<8x128xf32>
    %88 = vector.extract_strided_slice %73 {offsets = [0, 384], sizes = [8, 128], strides = [1, 1]} : vector<8x512xf32> to vector<8x128xf32>
    %89 = arith.negf %88 : vector<8x128xf32>
    %90 = math.exp %89 : vector<8x128xf32>
    %cst_32 = arith.constant 1.000000e+00 : f32
    %91 = vector.broadcast %cst_32 : f32 to vector<8x128xf32>
    %92 = arith.addf %91, %90 : vector<8x128xf32>
    %93 = arith.divf %91, %92 : vector<8x128xf32>
    %94 = arith.mulf %85, %66 : vector<8x128xf32>
    %95 = arith.mulf %79, %87 : vector<8x128xf32>
    %96 = arith.addf %94, %95 : vector<8x128xf32>
    %97 = math.tanh %96 : vector<8x128xf32>
    %98 = arith.mulf %93, %97 : vector<8x128xf32>
    %c16_33 = arith.constant 16 : index
    %c0_34 = arith.constant 0 : index
    %99 = vector.load %arg6[%c16_33, %c0_34] : memref<64x128xf32, #tpu.memory_space<vmem>>, vector<8x128xf32>
    tpu.vector_store %arg6[%c16_33, %c0_34], %98 {strides = array<i32>} : memref<64x128xf32, #tpu.memory_space<vmem>>, vector<8x128xf32>,
    %c24 = arith.constant 24 : index
    %c0_35 = arith.constant 0 : index
    %100 = vector.load %arg7[%c24, %c0_35] : memref<64x512xf32, #tpu.memory_space<vmem>>, vector<8x512xf32>
    %101 = arith.truncf %98 : vector<8x128xf32> to vector<8x128xbf16>
    %cst_36 = arith.constant dense<0.000000e+00> : vector<8x512xf32>
    %102 = tpu.matmul %101, %7, %cst_36 {dimension_numbers = #tpu.dot_dimension_numbers<[1], [0], [0], [1], [0, 0, 1, 1], [], []>} : vector<8x128xbf16>, vector<128x512xbf16>, vector<8x512xf32> -> vector<8x512xf32>
    %103 = arith.addf %100, %102 : vector<8x512xf32>
    %104 = vector.extract_strided_slice %103 {offsets = [0, 0], sizes = [8, 128], strides = [1, 1]} : vector<8x512xf32> to vector<8x128xf32>
    %105 = arith.negf %104 : vector<8x128xf32>
    %106 = math.exp %105 : vector<8x128xf32>
    %cst_37 = arith.constant 1.000000e+00 : f32
    %107 = vector.broadcast %cst_37 : f32 to vector<8x128xf32>
    %108 = arith.addf %107, %106 : vector<8x128xf32>
    %109 = arith.divf %107, %108 : vector<8x128xf32>
    %110 = vector.extract_strided_slice %103 {offsets = [0, 128], sizes = [8, 128], strides = [1, 1]} : vector<8x512xf32> to vector<8x128xf32>
    %111 = arith.negf %110 : vector<8x128xf32>
    %112 = math.exp %111 : vector<8x128xf32>
    %cst_38 = arith.constant 1.000000e+00 : f32
    %113 = vector.broadcast %cst_38 : f32 to vector<8x128xf32>
    %114 = arith.addf %113, %112 : vector<8x128xf32>
    %115 = arith.divf %113, %114 : vector<8x128xf32>
    %116 = vector.extract_strided_slice %103 {offsets = [0, 256], sizes = [8, 128], strides = [1, 1]} : vector<8x512xf32> to vector<8x128xf32>
    %117 = math.tanh %116 : vector<8x128xf32>
    %118 = vector.extract_strided_slice %103 {offsets = [0, 384], sizes = [8, 128], strides = [1, 1]} : vector<8x512xf32> to vector<8x128xf32>
    %119 = arith.negf %118 : vector<8x128xf32>
    %120 = math.exp %119 : vector<8x128xf32>
    %cst_39 = arith.constant 1.000000e+00 : f32
    %121 = vector.broadcast %cst_39 : f32 to vector<8x128xf32>
    %122 = arith.addf %121, %120 : vector<8x128xf32>
    %123 = arith.divf %121, %122 : vector<8x128xf32>
    %124 = arith.mulf %115, %96 : vector<8x128xf32>
    %125 = arith.mulf %109, %117 : vector<8x128xf32>
    %126 = arith.addf %124, %125 : vector<8x128xf32>
    %127 = math.tanh %126 : vector<8x128xf32>
    %128 = arith.mulf %123, %127 : vector<8x128xf32>
    %c24_40 = arith.constant 24 : index
    %c0_41 = arith.constant 0 : index
    %129 = vector.load %arg6[%c24_40, %c0_41] : memref<64x128xf32, #tpu.memory_space<vmem>>, vector<8x128xf32>
    tpu.vector_store %arg6[%c24_40, %c0_41], %128 {strides = array<i32>} : memref<64x128xf32, #tpu.memory_space<vmem>>, vector<8x128xf32>,
    %c32 = arith.constant 32 : index
    %c0_42 = arith.constant 0 : index
    %130 = vector.load %arg7[%c32, %c0_42] : memref<64x512xf32, #tpu.memory_space<vmem>>, vector<8x512xf32>
    %131 = arith.truncf %128 : vector<8x128xf32> to vector<8x128xbf16>
    %cst_43 = arith.constant dense<0.000000e+00> : vector<8x512xf32>
    %132 = tpu.matmul %131, %7, %cst_43 {dimension_numbers = #tpu.dot_dimension_numbers<[1], [0], [0], [1], [0, 0, 1, 1], [], []>} : vector<8x128xbf16>, vector<128x512xbf16>, vector<8x512xf32> -> vector<8x512xf32>
    %133 = arith.addf %130, %132 : vector<8x512xf32>
    %134 = vector.extract_strided_slice %133 {offsets = [0, 0], sizes = [8, 128], strides = [1, 1]} : vector<8x512xf32> to vector<8x128xf32>
    %135 = arith.negf %134 : vector<8x128xf32>
    %136 = math.exp %135 : vector<8x128xf32>
    %cst_44 = arith.constant 1.000000e+00 : f32
    %137 = vector.broadcast %cst_44 : f32 to vector<8x128xf32>
    %138 = arith.addf %137, %136 : vector<8x128xf32>
    %139 = arith.divf %137, %138 : vector<8x128xf32>
    %140 = vector.extract_strided_slice %133 {offsets = [0, 128], sizes = [8, 128], strides = [1, 1]} : vector<8x512xf32> to vector<8x128xf32>
    %141 = arith.negf %140 : vector<8x128xf32>
    %142 = math.exp %141 : vector<8x128xf32>
    %cst_45 = arith.constant 1.000000e+00 : f32
    %143 = vector.broadcast %cst_45 : f32 to vector<8x128xf32>
    %144 = arith.addf %143, %142 : vector<8x128xf32>
    %145 = arith.divf %143, %144 : vector<8x128xf32>
    %146 = vector.extract_strided_slice %133 {offsets = [0, 256], sizes = [8, 128], strides = [1, 1]} : vector<8x512xf32> to vector<8x128xf32>
    %147 = math.tanh %146 : vector<8x128xf32>
    %148 = vector.extract_strided_slice %133 {offsets = [0, 384], sizes = [8, 128], strides = [1, 1]} : vector<8x512xf32> to vector<8x128xf32>
    %149 = arith.negf %148 : vector<8x128xf32>
    %150 = math.exp %149 : vector<8x128xf32>
    %cst_46 = arith.constant 1.000000e+00 : f32
    %151 = vector.broadcast %cst_46 : f32 to vector<8x128xf32>
    %152 = arith.addf %151, %150 : vector<8x128xf32>
    %153 = arith.divf %151, %152 : vector<8x128xf32>
    %154 = arith.mulf %145, %126 : vector<8x128xf32>
    %155 = arith.mulf %139, %147 : vector<8x128xf32>
    %156 = arith.addf %154, %155 : vector<8x128xf32>
    %157 = math.tanh %156 : vector<8x128xf32>
    %158 = arith.mulf %153, %157 : vector<8x128xf32>
    %c32_47 = arith.constant 32 : index
    %c0_48 = arith.constant 0 : index
    %159 = vector.load %arg6[%c32_47, %c0_48] : memref<64x128xf32, #tpu.memory_space<vmem>>, vector<8x128xf32>
    tpu.vector_store %arg6[%c32_47, %c0_48], %158 {strides = array<i32>} : memref<64x128xf32, #tpu.memory_space<vmem>>, vector<8x128xf32>,
    %c40 = arith.constant 40 : index
    %c0_49 = arith.constant 0 : index
    %160 = vector.load %arg7[%c40, %c0_49] : memref<64x512xf32, #tpu.memory_space<vmem>>, vector<8x512xf32>
    %161 = arith.truncf %158 : vector<8x128xf32> to vector<8x128xbf16>
    %cst_50 = arith.constant dense<0.000000e+00> : vector<8x512xf32>
    %162 = tpu.matmul %161, %7, %cst_50 {dimension_numbers = #tpu.dot_dimension_numbers<[1], [0], [0], [1], [0, 0, 1, 1], [], []>} : vector<8x128xbf16>, vector<128x512xbf16>, vector<8x512xf32> -> vector<8x512xf32>
    %163 = arith.addf %160, %162 : vector<8x512xf32>
    %164 = vector.extract_strided_slice %163 {offsets = [0, 0], sizes = [8, 128], strides = [1, 1]} : vector<8x512xf32> to vector<8x128xf32>
    %165 = arith.negf %164 : vector<8x128xf32>
    %166 = math.exp %165 : vector<8x128xf32>
    %cst_51 = arith.constant 1.000000e+00 : f32
    %167 = vector.broadcast %cst_51 : f32 to vector<8x128xf32>
    %168 = arith.addf %167, %166 : vector<8x128xf32>
    %169 = arith.divf %167, %168 : vector<8x128xf32>
    %170 = vector.extract_strided_slice %163 {offsets = [0, 128], sizes = [8, 128], strides = [1, 1]} : vector<8x512xf32> to vector<8x128xf32>
    %171 = arith.negf %170 : vector<8x128xf32>
    %172 = math.exp %171 : vector<8x128xf32>
    %cst_52 = arith.constant 1.000000e+00 : f32
    %173 = vector.broadcast %cst_52 : f32 to vector<8x128xf32>
    %174 = arith.addf %173, %172 : vector<8x128xf32>
    %175 = arith.divf %173, %174 : vector<8x128xf32>
    %176 = vector.extract_strided_slice %163 {offsets = [0, 256], sizes = [8, 128], strides = [1, 1]} : vector<8x512xf32> to vector<8x128xf32>
    %177 = math.tanh %176 : vector<8x128xf32>
    %178 = vector.extract_strided_slice %163 {offsets = [0, 384], sizes = [8, 128], strides = [1, 1]} : vector<8x512xf32> to vector<8x128xf32>
    %179 = arith.negf %178 : vector<8x128xf32>
    %180 = math.exp %179 : vector<8x128xf32>
    %cst_53 = arith.constant 1.000000e+00 : f32
    %181 = vector.broadcast %cst_53 : f32 to vector<8x128xf32>
    %182 = arith.addf %181, %180 : vector<8x128xf32>
    %183 = arith.divf %181, %182 : vector<8x128xf32>
    %184 = arith.mulf %175, %156 : vector<8x128xf32>
    %185 = arith.mulf %169, %177 : vector<8x128xf32>
    %186 = arith.addf %184, %185 : vector<8x128xf32>
    %187 = math.tanh %186 : vector<8x128xf32>
    %188 = arith.mulf %183, %187 : vector<8x128xf32>
    %c40_54 = arith.constant 40 : index
    %c0_55 = arith.constant 0 : index
    %189 = vector.load %arg6[%c40_54, %c0_55] : memref<64x128xf32, #tpu.memory_space<vmem>>, vector<8x128xf32>
    tpu.vector_store %arg6[%c40_54, %c0_55], %188 {strides = array<i32>} : memref<64x128xf32, #tpu.memory_space<vmem>>, vector<8x128xf32>,
    %c48 = arith.constant 48 : index
    %c0_56 = arith.constant 0 : index
    %190 = vector.load %arg7[%c48, %c0_56] : memref<64x512xf32, #tpu.memory_space<vmem>>, vector<8x512xf32>
    %191 = arith.truncf %188 : vector<8x128xf32> to vector<8x128xbf16>
    %cst_57 = arith.constant dense<0.000000e+00> : vector<8x512xf32>
    %192 = tpu.matmul %191, %7, %cst_57 {dimension_numbers = #tpu.dot_dimension_numbers<[1], [0], [0], [1], [0, 0, 1, 1], [], []>} : vector<8x128xbf16>, vector<128x512xbf16>, vector<8x512xf32> -> vector<8x512xf32>
    %193 = arith.addf %190, %192 : vector<8x512xf32>
    %194 = vector.extract_strided_slice %193 {offsets = [0, 0], sizes = [8, 128], strides = [1, 1]} : vector<8x512xf32> to vector<8x128xf32>
    %195 = arith.negf %194 : vector<8x128xf32>
    %196 = math.exp %195 : vector<8x128xf32>
    %cst_58 = arith.constant 1.000000e+00 : f32
    %197 = vector.broadcast %cst_58 : f32 to vector<8x128xf32>
    %198 = arith.addf %197, %196 : vector<8x128xf32>
    %199 = arith.divf %197, %198 : vector<8x128xf32>
    %200 = vector.extract_strided_slice %193 {offsets = [0, 128], sizes = [8, 128], strides = [1, 1]} : vector<8x512xf32> to vector<8x128xf32>
    %201 = arith.negf %200 : vector<8x128xf32>
    %202 = math.exp %201 : vector<8x128xf32>
    %cst_59 = arith.constant 1.000000e+00 : f32
    %203 = vector.broadcast %cst_59 : f32 to vector<8x128xf32>
    %204 = arith.addf %203, %202 : vector<8x128xf32>
    %205 = arith.divf %203, %204 : vector<8x128xf32>
    %206 = vector.extract_strided_slice %193 {offsets = [0, 256], sizes = [8, 128], strides = [1, 1]} : vector<8x512xf32> to vector<8x128xf32>
    %207 = math.tanh %206 : vector<8x128xf32>
    %208 = vector.extract_strided_slice %193 {offsets = [0, 384], sizes = [8, 128], strides = [1, 1]} : vector<8x512xf32> to vector<8x128xf32>
    %209 = arith.negf %208 : vector<8x128xf32>
    %210 = math.exp %209 : vector<8x128xf32>
    %cst_60 = arith.constant 1.000000e+00 : f32
    %211 = vector.broadcast %cst_60 : f32 to vector<8x128xf32>
    %212 = arith.addf %211, %210 : vector<8x128xf32>
    %213 = arith.divf %211, %212 : vector<8x128xf32>
    %214 = arith.mulf %205, %186 : vector<8x128xf32>
    %215 = arith.mulf %199, %207 : vector<8x128xf32>
    %216 = arith.addf %214, %215 : vector<8x128xf32>
    %217 = math.tanh %216 : vector<8x128xf32>
    %218 = arith.mulf %213, %217 : vector<8x128xf32>
    %c48_61 = arith.constant 48 : index
    %c0_62 = arith.constant 0 : index
    %219 = vector.load %arg6[%c48_61, %c0_62] : memref<64x128xf32, #tpu.memory_space<vmem>>, vector<8x128xf32>
    tpu.vector_store %arg6[%c48_61, %c0_62], %218 {strides = array<i32>} : memref<64x128xf32, #tpu.memory_space<vmem>>, vector<8x128xf32>,
    %c56 = arith.constant 56 : index
    %c0_63 = arith.constant 0 : index
    %220 = vector.load %arg7[%c56, %c0_63] : memref<64x512xf32, #tpu.memory_space<vmem>>, vector<8x512xf32>
    %221 = arith.truncf %218 : vector<8x128xf32> to vector<8x128xbf16>
    %cst_64 = arith.constant dense<0.000000e+00> : vector<8x512xf32>
    %222 = tpu.matmul %221, %7, %cst_64 {dimension_numbers = #tpu.dot_dimension_numbers<[1], [0], [0], [1], [0, 0, 1, 1], [], []>} : vector<8x128xbf16>, vector<128x512xbf16>, vector<8x512xf32> -> vector<8x512xf32>
    %223 = arith.addf %220, %222 : vector<8x512xf32>
    %224 = vector.extract_strided_slice %223 {offsets = [0, 0], sizes = [8, 128], strides = [1, 1]} : vector<8x512xf32> to vector<8x128xf32>
    %225 = arith.negf %224 : vector<8x128xf32>
    %226 = math.exp %225 : vector<8x128xf32>
    %cst_65 = arith.constant 1.000000e+00 : f32
    %227 = vector.broadcast %cst_65 : f32 to vector<8x128xf32>
    %228 = arith.addf %227, %226 : vector<8x128xf32>
    %229 = arith.divf %227, %228 : vector<8x128xf32>
    %230 = vector.extract_strided_slice %223 {offsets = [0, 128], sizes = [8, 128], strides = [1, 1]} : vector<8x512xf32> to vector<8x128xf32>
    %231 = arith.negf %230 : vector<8x128xf32>
    %232 = math.exp %231 : vector<8x128xf32>
    %cst_66 = arith.constant 1.000000e+00 : f32
    %233 = vector.broadcast %cst_66 : f32 to vector<8x128xf32>
    %234 = arith.addf %233, %232 : vector<8x128xf32>
    %235 = arith.divf %233, %234 : vector<8x128xf32>
    %236 = vector.extract_strided_slice %223 {offsets = [0, 256], sizes = [8, 128], strides = [1, 1]} : vector<8x512xf32> to vector<8x128xf32>
    %237 = math.tanh %236 : vector<8x128xf32>
    %238 = vector.extract_strided_slice %223 {offsets = [0, 384], sizes = [8, 128], strides = [1, 1]} : vector<8x512xf32> to vector<8x128xf32>
    %239 = arith.negf %238 : vector<8x128xf32>
    %240 = math.exp %239 : vector<8x128xf32>
    %cst_67 = arith.constant 1.000000e+00 : f32
    %241 = vector.broadcast %cst_67 : f32 to vector<8x128xf32>
    %242 = arith.addf %241, %240 : vector<8x128xf32>
    %243 = arith.divf %241, %242 : vector<8x128xf32>
    %244 = arith.mulf %235, %216 : vector<8x128xf32>
    %245 = arith.mulf %229, %237 : vector<8x128xf32>
    %246 = arith.addf %244, %245 : vector<8x128xf32>
    %247 = math.tanh %246 : vector<8x128xf32>
    %248 = arith.mulf %243, %247 : vector<8x128xf32>
    %c56_68 = arith.constant 56 : index
    %c0_69 = arith.constant 0 : index
    %249 = vector.load %arg6[%c56_68, %c0_69] : memref<64x128xf32, #tpu.memory_space<vmem>>, vector<8x128xf32>
    tpu.vector_store %arg6[%c56_68, %c0_69], %248 {strides = array<i32>} : memref<64x128xf32, #tpu.memory_space<vmem>>, vector<8x128xf32>,
    return
  }
}

</mosaic_0001>

<llo_original>
// kernel: tpu_custom_call.1
$region0: #{tpu_custom_call.1}
  #allocation0 [shape = 'u32[]', space=smem, size = 0x4, offset = 0x4, fixed_abs, tag = 'smem constant byte address 0x4 - core index']
  #allocation1 [shape = 'u32[144,128]{1,0:T(1,128)}', space=vmem, size = 0x12000, scoped, tag = 'internal scratch']
  #allocation2 [shape = 'f32[64,512]{1,0:T(8,128)}', space=vmem, size = 0x20000, scoped, tag = 'scratch operand']
  %s0 = inlined_call_operand.vmem [shape: bf16[64,32], index: 0, kind: input, shape index: {}]
  %s1 = inlined_call_operand.hbm [shape: bf16[32,512], index: 1, kind: input, shape index: {}]
  %s2 = inlined_call_operand.hbm [shape: bf16[128,512], index: 2, kind: input, shape index: {}]
  %s3 = inlined_call_operand.vmem [shape: f32[1,512], index: 3, kind: input, shape index: {}]
  %s4 = inlined_call_operand.vmem [shape: f32[8,128], index: 4, kind: input, shape index: {}]
  %s5 = inlined_call_operand.vmem [shape: f32[8,128], index: 5, kind: input, shape index: {}]
  %s6 = inlined_call_operand.hbm [shape: f32[64,128], index: 6, kind: output, shape index: {}]
  %s7 = sld [smem:[#allocation0]]
  $region42: #{tpu_custom_call.1} parent=0
    _
  %s9 = ssub.s32 1, %s7
  %s10 = scalar_select 0, %s9, %s7
  $region1: #{tpu_custom_call.1} parent=0
    #allocation3 [shape = 'u8[32768]{0}', space=vmem, size = 0x8000, scoped, tag = 'input window, operand 1, single buffered']
    #allocation4 [shape = 's32[1]{0}', space=sflag, size = 0x4, scoped, tag = 'scoped memory for tpu_custom_call.1']
    #allocation5 [shape = 's32[1]{0}', space=sflag, size = 0x4, scoped, tag = 'scoped memory for tpu_custom_call.1']
    #allocation6 [shape = 'u8[131072]{0}', space=vmem, size = 0x20000, scoped, tag = 'input window, operand 2, single buffered']
    #allocation7 [shape = 's32[1]{0}', space=sflag, size = 0x4, scoped, tag = 'scoped memory for tpu_custom_call.1']
    #allocation8 [shape = 'u8[32768]{0}', space=vmem, size = 0x8000, scoped, tag = 'output window, operand 0, single buffered']
    %11 = vsyncpa [#allocation4], 0
    %12 = vsyncpa [#allocation7], 0
    %13 = vsyncpa [#allocation5], 0
    // Predicated region
    $region2: #{tpu_custom_call.1} parent=1 // pred_check
      _
    $region3: #{tpu_custom_call.1} parent=1 // pred_check_branch
      %15 = sbr.rel (0) target = $region5
    $region4: #{tpu_custom_call.1} parent=1 // pred_region
      _
    $region5: #{tpu_custom_call.1} parent=1 // pred_fallthru
      _
    // Predicated region
    $region6: #{tpu_custom_call.1} parent=1 // pred_check
      _
    $region7: #{tpu_custom_call.1} parent=1 // pred_check_branch
      %17 = sbr.rel (0) target = $region9
    $region8: #{tpu_custom_call.1} parent=1 // pred_region
      %s19 = ssub.s32 1024, 1024
      %20 = vsyncadd [#allocation4], %s19
      %s21 = sshll.u32 [#allocation3], 4
      %s22 = int_to_ptr.vmem [resolvable:$true] %s21
      %27 = dma.hbm_to_vmem [thread:$0]  %s1, 1024, %s22, [#allocation4], 256, 256, 16
    $region9: #{tpu_custom_call.1} parent=1 // pred_fallthru
      _
    // Predicated region
    $region10: #{tpu_custom_call.1} parent=1 // pred_check
      _
    $region11: #{tpu_custom_call.1} parent=1 // pred_check_branch
      %29 = sbr.rel (0) target = $region13
    $region12: #{tpu_custom_call.1} parent=1 // pred_region
      %s31 = ssub.s32 4096, 4096
      %32 = vsyncadd [#allocation7], %s31
      %s33 = sshll.u32 [#allocation6], 4
      %s34 = int_to_ptr.vmem [resolvable:$true] %s33
      %39 = dma.hbm_to_vmem [thread:$0]  %s2, 4096, %s34, [#allocation7], 256, 256, 16
    $region13: #{tpu_custom_call.1} parent=1 // pred_fallthru
      _
    // Predicated region
    $region14: #{tpu_custom_call.1} parent=1 // pred_check
      _
    $region15: #{tpu_custom_call.1} parent=1 // pred_check_branch
      %41 = sbr.rel (0) target = $region17
    $region16: #{tpu_custom_call.1} parent=1 // pred_region
      _
    $region17: #{tpu_custom_call.1} parent=1 // pred_fallthru
      _
    // Predicated region
    $region18: #{tpu_custom_call.1} parent=1 // pred_check
      _
    $region19: #{tpu_custom_call.1} parent=1 // pred_check_branch
      %43 = sbr.rel (0) target = $region21
    $region20: #{tpu_custom_call.1} parent=1 // pred_region
      _
    $region21: #{tpu_custom_call.1} parent=1 // pred_fallthru
      _
    // Predicated region
    $region22: #{tpu_custom_call.1} parent=1 // pred_check
      _
    $region23: #{tpu_custom_call.1} parent=1 // pred_check_branch
      %45 = sbr.rel (0) target = $region25
    $region24: #{tpu_custom_call.1} parent=1 // pred_region
      _
    $region25: #{tpu_custom_call.1} parent=1 // pred_fallthru
      _
    // Predicated region
    $region26: #{tpu_custom_call.1} parent=1 // pred_check
      _
    $region27: #{tpu_custom_call.1} parent=1 // pred_check_branch
      %47 = sbr.rel (0) target = $region29
    $region28: #{tpu_custom_call.1} parent=1 // pred_region
      %48 = dma.done [#allocation4], 1024
    $region29: #{tpu_custom_call.1} parent=1 // pred_fallthru
      _
    // Predicated region
    $region30: #{tpu_custom_call.1} parent=1 // pred_check
      _
    $region31: #{tpu_custom_call.1} parent=1 // pred_check_branch
      %50 = sbr.rel (0) target = $region33
    $region32: #{tpu_custom_call.1} parent=1 // pred_region
      %51 = dma.done [#allocation7], 4096
    $region33: #{tpu_custom_call.1} parent=1 // pred_fallthru
      _
    %v53 = vld [vmem:[%s0] sm:$0xf]
    %v54 = vld [vmem:[%s0 + $0x4] sm:$0xf]
    %v55 = vld [vmem:[%s0 + $0x8] sm:$0xf]
    %v56 = vld [vmem:[%s0 + $0xc] sm:$0xf]
    %v57 = vld [vmem:[%s0 + $0x10] sm:$0xf]
    %v58 = vld [vmem:[%s0 + $0x14] sm:$0xf]
    %v59 = vld [vmem:[%s0 + $0x18] sm:$0xf]
    %v60 = vld [vmem:[%s0 + $0x1c] sm:$0xf]
    %v61 = vld [vmem:[#allocation3] sm:$0xff]
    %v62 = vld [vmem:[#allocation3 + $0x8] sm:$0xff]
    %v63 = vld [vmem:[#allocation3 + $0x10] sm:$0xff]
    %v64 = vld [vmem:[#allocation3 + $0x18] sm:$0xff]
    %v65 = vld [vmem:[#allocation3 + $0x20] sm:$0xff]
    %v66 = vld [vmem:[#allocation3 + $0x28] sm:$0xff]
    %v67 = vld [vmem:[#allocation3 + $0x30] sm:$0xff]
    %v68 = vld [vmem:[#allocation3 + $0x38] sm:$0xff]
    %v69 = vld [vmem:[%s3] sm:$0xf]
    %v71 = vlaneseq
    %v72 = vshrl.u32 %v71, 7
    %v73 = vsub.s32 0, %v72
    %v74 = vrot.slane %v69, %v73
    %v75 = vlaneseq
    %v76 = vshrl.u32 %v75, 7
    %v77 = vsub.s32 1, %v76
    %v78 = vrot.slane %v69, %v77
    %v79 = vlaneseq
    %v80 = vshrl.u32 %v79, 7
    %v81 = vsub.s32 2, %v80
    %v82 = vrot.slane %v69, %v81
    %v83 = vlaneseq
    %v84 = vshrl.u32 %v83, 7
    %v85 = vsub.s32 3, %v84
    %v86 = vrot.slane %v69, %v85
    %v99 = vunpack.c.l.b16 %v53
    %v100 = vunpack.c.l.b16 %v54
    %v101 = vunpack.c.l.b16 %v55
    %v102 = vunpack.c.l.b16 %v56
    %v103 = vunpack.c.l.b16 %v57
    %v104 = vunpack.c.l.b16 %v58
    %v105 = vunpack.c.l.b16 %v59
    %v106 = vunpack.c.l.b16 %v60
    %v107 = vpack.c.b16 %v100, %v99
    %v108 = vpack.c.b16 %v102, %v101
    %v109 = vpack.c.b16 %v104, %v103
    %v110 = vpack.c.b16 %v106, %v105
    %v119 = vunpack.c.l.b16 %v61
    %v120 = vunpack.c.h.b16 %v61
    %v121 = vunpack.c.l.b16 %v62
    %v122 = vunpack.c.h.b16 %v62
    %v123 = vunpack.c.l.b16 %v63
    %v124 = vunpack.c.h.b16 %v63
    %v125 = vunpack.c.l.b16 %v64
    %v126 = vunpack.c.h.b16 %v64
    %v127 = vunpack.c.l.b16 %v65
    %v128 = vunpack.c.h.b16 %v65
    %v129 = vunpack.c.l.b16 %v66
    %v130 = vunpack.c.h.b16 %v66
    %v131 = vunpack.c.l.b16 %v67
    %v132 = vunpack.c.h.b16 %v67
    %v133 = vunpack.c.l.b16 %v68
    %v134 = vunpack.c.h.b16 %v68
    %v135 = vpack.c.b16 %v123, %v119
    %v136 = vpack.c.b16 %v124, %v120
    %v137 = vpack.c.b16 %v125, %v121
    %v138 = vpack.c.b16 %v126, %v122
    %v139 = vpack.c.b16 %v131, %v127
    %v140 = vpack.c.b16 %v132, %v128
    %v141 = vpack.c.b16 %v133, %v129
    %v142 = vpack.c.b16 %v134, %v130
    %vm151 = vcmask 261120
    %v153 = vsel %vm151, %v107, 0
    %v156 = vsel %vm151, %v108, 0
    %v159 = vsel %vm151, %v109, 0
    %v162 = vsel %vm151, %v110, 0
    %164 = vmatprep.subr.bf16.mxu0 0
    %165 = vmatpush1.bf16.msra.mxu0 0
    %166 = vmatprep.subr.bf16.mxu0 0
    %167 = vmatpush1.bf16.msra.mxu0 0
    %168 = vmatprep.subr.bf16.mxu0 0
    %169 = vmatpush1.bf16.msra.mxu0 0
    %170 = vmatprep.subr.bf16.mxu0 0
    %171 = vmatpush1.bf16.msra.mxu0 0
    %172 = vmatprep.subr.bf16.mxu0 0
    %173 = vmatpush1.bf16.msra.mxu0 0
    %174 = vmatprep.subr.bf16.mxu0 0
    %175 = vmatpush1.bf16.msra.mxu0 0
    %176 = vmatprep.subr.bf16.mxu0 %v140
    %177 = vmatpush1.bf16.msra.mxu0 %v139
    %178 = vmatprep.subr.bf16.mxu0 %v136
    %179 = vmatpush1.bf16.msra.mxu0 %v135
    %180 = vmatprep.subr.bf16.mxu0 0
    %181 = vmatpush2.bf16.msra.mxu0 0
    %182 = vmatprep.subr.bf16.mxu0 0
    %183 = vmatpush2.bf16.msra.mxu0 0
    %184 = vmatprep.subr.bf16.mxu0 0
    %185 = vmatpush2.bf16.msra.mxu0 0
    %186 = vmatprep.subr.bf16.mxu0 0
    %187 = vmatpush2.bf16.msra.mxu0 0
    %188 = vmatprep.subr.bf16.mxu0 0
    %189 = vmatpush2.bf16.msra.mxu0 0
    %190 = vmatprep.subr.bf16.mxu0 0
    %191 = vmatpush2.bf16.msra.mxu0 0
    %192 = vmatprep.subr.bf16.mxu0 0
    %193 = vmatpush2.bf16.msra.mxu0 0
    %194 = vmatprep.subr.bf16.mxu0 0
    %195 = vmatpush2.bf16.msra.mxu0 0
    %196 = vmatprep.mubr.bf16.mxu0 0
    %197 = vmatmul.mubr.bf16.gmra.mxu0 %v153
    %v198 = vpop.f32.mrf.mxu0
    %v199 = vadd.f32 %v74, %v198
    %v200 = vpop.f32.mrf.mxu0
    %v201 = vadd.f32 %v78, %v200
    %v202 = vpop.f32.mrf.mxu0
    %v203 = vadd.f32 %v74, %v202
    %v204 = vpop.f32.mrf.mxu0
    %v205 = vadd.f32 %v78, %v204
    %206 = vmatprep.mubr.bf16.mxu0 0
    %207 = vmatmul.mubr.bf16.gmra.mxu0 %v156
    %v208 = vpop.f32.mrf.mxu0
    %v209 = vadd.f32 %v74, %v208
    %v210 = vpop.f32.mrf.mxu0
    %v211 = vadd.f32 %v78, %v210
    %v212 = vpop.f32.mrf.mxu0
    %v213 = vadd.f32 %v74, %v212
    %v214 = vpop.f32.mrf.mxu0
    %v215 = vadd.f32 %v78, %v214
    %216 = vmatprep.mubr.bf16.mxu0 0
    %217 = vmatmul.mubr.bf16.gmra.mxu0 %v159
    %v218 = vpop.f32.mrf.mxu0
    %v219 = vadd.f32 %v74, %v218
    %v220 = vpop.f32.mrf.mxu0
    %v221 = vadd.f32 %v78, %v220
    %v222 = vpop.f32.mrf.mxu0
    %v223 = vadd.f32 %v74, %v222
    %v224 = vpop.f32.mrf.mxu0
    %v225 = vadd.f32 %v78, %v224
    %226 = vmatprep.mubr.bf16.mxu0 0
    %227 = vmatmul.mubr.bf16.gmra.mxu0 %v162
    %v228 = vpop.f32.mrf.mxu0
    %v229 = vadd.f32 %v74, %v228
    %v230 = vpop.f32.mrf.mxu0
    %v231 = vadd.f32 %v78, %v230
    %v232 = vpop.f32.mrf.mxu0
    %v233 = vadd.f32 %v74, %v232
    %v234 = vpop.f32.mrf.mxu0
    %v235 = vadd.f32 %v78, %v234
    %236 = vdwg.mxu0
    %237 = vmatprep.subr.bf16.mxu0 0
    %238 = vmatpush1.bf16.msra.mxu0 0
    %239 = vmatprep.subr.bf16.mxu0 0
    %240 = vmatpush1.bf16.msra.mxu0 0
    %241 = vmatprep.subr.bf16.mxu0 0
    %242 = vmatpush1.bf16.msra.mxu0 0
    %243 = vmatprep.subr.bf16.mxu0 0
    %244 = vmatpush1.bf16.msra.mxu0 0
    %245 = vmatprep.subr.bf16.mxu0 0
    %246 = vmatpush1.bf16.msra.mxu0 0
    %247 = vmatprep.subr.bf16.mxu0 0
    %248 = vmatpush1.bf16.msra.mxu0 0
    %249 = vmatprep.subr.bf16.mxu0 %v142
    %250 = vmatpush1.bf16.msra.mxu0 %v141
    %251 = vmatprep.subr.bf16.mxu0 %v138
    %252 = vmatpush1.bf16.msra.mxu0 %v137
    %253 = vmatprep.subr.bf16.mxu0 0
    %254 = vmatpush2.bf16.msra.mxu0 0
    %255 = vmatprep.subr.bf16.mxu0 0
    %256 = vmatpush2.bf16.msra.mxu0 0
    %257 = vmatprep.subr.bf16.mxu0 0
    %258 = vmatpush2.bf16.msra.mxu0 0
    %259 = vmatprep.subr.bf16.mxu0 0
    %260 = vmatpush2.bf16.msra.mxu0 0
    %261 = vmatprep.subr.bf16.mxu0 0
    %262 = vmatpush2.bf16.msra.mxu0 0
    %263 = vmatprep.subr.bf16.mxu0 0
    %264 = vmatpush2.bf16.msra.mxu0 0
    %265 = vmatprep.subr.bf16.mxu0 0
    %266 = vmatpush2.bf16.msra.mxu0 0
    %267 = vmatprep.subr.bf16.mxu0 0
    %268 = vmatpush2.bf16.msra.mxu0 0
    %269 = vmatprep.mubr.bf16.mxu0 0
    %270 = vmatmul.mubr.bf16.gmra.mxu0 %v153
    %v271 = vpop.f32.mrf.mxu0
    %v272 = vadd.f32 %v82, %v271
    %v273 = vpop.f32.mrf.mxu0
    %v274 = vadd.f32 %v86, %v273
    %v275 = vpop.f32.mrf.mxu0
    %v276 = vadd.f32 %v82, %v275
    %v277 = vpop.f32.mrf.mxu0
    %v278 = vadd.f32 %v86, %v277
    %279 = vmatprep.mubr.bf16.mxu0 0
    %280 = vmatmul.mubr.bf16.gmra.mxu0 %v156
    %v281 = vpop.f32.mrf.mxu0
    %v282 = vadd.f32 %v82, %v281
    %v283 = vpop.f32.mrf.mxu0
    %v284 = vadd.f32 %v86, %v283
    %v285 = vpop.f32.mrf.mxu0
    %v286 = vadd.f32 %v82, %v285
    %v287 = vpop.f32.mrf.mxu0
    %v288 = vadd.f32 %v86, %v287
    %289 = vmatprep.mubr.bf16.mxu0 0
    %290 = vmatmul.mubr.bf16.gmra.mxu0 %v159
    %v291 = vpop.f32.mrf.mxu0
    %v292 = vadd.f32 %v82, %v291
    %v293 = vpop.f32.mrf.mxu0
    %v294 = vadd.f32 %v86, %v293
    %v295 = vpop.f32.mrf.mxu0
    %v296 = vadd.f32 %v82, %v295
    %v297 = vpop.f32.mrf.mxu0
    %v298 = vadd.f32 %v86, %v297
    %299 = vmatprep.mubr.bf16.mxu0 0
    %300 = vmatmul.mubr.bf16.gmra.mxu0 %v162
    %v301 = vpop.f32.mrf.mxu0
    %v302 = vadd.f32 %v82, %v301
    %v303 = vpop.f32.mrf.mxu0
    %v304 = vadd.f32 %v86, %v303
    %v305 = vpop.f32.mrf.mxu0
    %v306 = vadd.f32 %v82, %v305
    %v307 = vpop.f32.mrf.mxu0
    %v308 = vadd.f32 %v86, %v307
    %309 = vdwg.mxu0
    %310 = vst [vmem:[#allocation2] sm:$0xff] %v199
    %311 = vst [vmem:[#allocation2 + $0x8] sm:$0xff] %v201
    %312 = vst [vmem:[#allocation2 + $0x10] sm:$0xff] %v272
    %313 = vst [vmem:[#allocation2 + $0x18] sm:$0xff] %v274
    %314 = vst [vmem:[#allocation2 + $0x20] sm:$0xff] %v203
    %315 = vst [vmem:[#allocation2 + $0x28] sm:$0xff] %v205
    %316 = vst [vmem:[#allocation2 + $0x30] sm:$0xff] %v276
    %317 = vst [vmem:[#allocation2 + $0x38] sm:$0xff] %v278
    %318 = vst [vmem:[#allocation2 + $0x40] sm:$0xff] %v209
    %319 = vst [vmem:[#allocation2 + $0x48] sm:$0xff] %v211
    %320 = vst [vmem:[#allocation2 + $0x50] sm:$0xff] %v282
    %321 = vst [vmem:[#allocation2 + $0x58] sm:$0xff] %v284
    %322 = vst [vmem:[#allocation2 + $0x60] sm:$0xff] %v213
    %323 = vst [vmem:[#allocation2 + $0x68] sm:$0xff] %v215
    %324 = vst [vmem:[#allocation2 + $0x70] sm:$0xff] %v286
    %325 = vst [vmem:[#allocation2 + $0x78] sm:$0xff] %v288
    %326 = vst [vmem:[#allocation2 + $0x80] sm:$0xff] %v219
    %327 = vst [vmem:[#allocation2 + $0x88] sm:$0xff] %v221
    %328 = vst [vmem:[#allocation2 + $0x90] sm:$0xff] %v292
    %329 = vst [vmem:[#allocation2 + $0x98] sm:$0xff] %v294
    %330 = vst [vmem:[#allocation2 + $0xa0] sm:$0xff] %v223
    %331 = vst [vmem:[#allocation2 + $0xa8] sm:$0xff] %v225
    %332 = vst [vmem:[#allocation2 + $0xb0] sm:$0xff] %v296
    %333 = vst [vmem:[#allocation2 + $0xb8] sm:$0xff] %v298
    %334 = vst [vmem:[#allocation2 + $0xc0] sm:$0xff] %v229
    %335 = vst [vmem:[#allocation2 + $0xc8] sm:$0xff] %v231
    %336 = vst [vmem:[#allocation2 + $0xd0] sm:$0xff] %v302
    %337 = vst [vmem:[#allocation2 + $0xd8] sm:$0xff] %v304
    %338 = vst [vmem:[#allocation2 + $0xe0] sm:$0xff] %v233
    %339 = vst [vmem:[#allocation2 + $0xe8] sm:$0xff] %v235
    %340 = vst [vmem:[#allocation2 + $0xf0] sm:$0xff] %v306
    %341 = vst [vmem:[#allocation2 + $0xf8] sm:$0xff] %v308
    %v342 = vld [vmem:[#allocation6] sm:$0xff]
    %v343 = vld [vmem:[#allocation6 + $0x8] sm:$0xff]
    %v344 = vld [vmem:[#allocation6 + $0x10] sm:$0xff]
    %v345 = vld [vmem:[#allocation6 + $0x18] sm:$0xff]
    %v346 = vld [vmem:[#allocation6 + $0x20] sm:$0xff]
    %v347 = vld [vmem:[#allocation6 + $0x28] sm:$0xff]
    %v348 = vld [vmem:[#allocation6 + $0x30] sm:$0xff]
    %v349 = vld [vmem:[#allocation6 + $0x38] sm:$0xff]
    %v350 = vld [vmem:[#allocation6 + $0x40] sm:$0xff]
    %v351 = vld [vmem:[#allocation6 + $0x48] sm:$0xff]
    %v352 = vld [vmem:[#allocation6 + $0x50] sm:$0xff]
    %v353 = vld [vmem:[#allocation6 + $0x58] sm:$0xff]
    %v354 = vld [vmem:[#allocation6 + $0x60] sm:$0xff]
    %v355 = vld [vmem:[#allocation6 + $0x68] sm:$0xff]
    %v356 = vld [vmem:[#allocation6 + $0x70] sm:$0xff]
    %v357 = vld [vmem:[#allocation6 + $0x78] sm:$0xff]
    %v358 = vld [vmem:[#allocation6 + $0x80] sm:$0xff]
    %v359 = vld [vmem:[#allocation6 + $0x88] sm:$0xff]
    %v360 = vld [vmem:[#allocation6 + $0x90] sm:$0xff]
    %v361 = vld [vmem:[#allocation6 + $0x98] sm:$0xff]
    %v362 = vld [vmem:[#allocation6 + $0xa0] sm:$0xff]
    %v363 = vld [vmem:[#allocation6 + $0xa8] sm:$0xff]
    %v364 = vld [vmem:[#allocation6 + $0xb0] sm:$0xff]
    %v365 = vld [vmem:[#allocation6 + $0xb8] sm:$0xff]
    %v366 = vld [vmem:[#allocation6 + $0xc0] sm:$0xff]
    %v367 = vld [vmem:[#allocation6 + $0xc8] sm:$0xff]
    %v368 = vld [vmem:[#allocation6 + $0xd0] sm:$0xff]
    %v369 = vld [vmem:[#allocation6 + $0xd8] sm:$0xff]
    %v370 = vld [vmem:[#allocation6 + $0xe0] sm:$0xff]
    %v371 = vld [vmem:[#allocation6 + $0xe8] sm:$0xff]
    %v372 = vld [vmem:[#allocation6 + $0xf0] sm:$0xff]
    %v373 = vld [vmem:[#allocation6 + $0xf8] sm:$0xff]
    %v374 = vld [vmem:[%s4] sm:$0xff]
    %v375 = vld [vmem:[%s5] sm:$0xff]
    %v376 = vld [vmem:[#allocation2] sm:$0xff]
    %v377 = vld [vmem:[#allocation2 + $0x8] sm:$0xff]
    %v378 = vld [vmem:[#allocation2 + $0x10] sm:$0xff]
    %v379 = vld [vmem:[#allocation2 + $0x18] sm:$0xff]
    %v380 = vpack.c.bf16 %v374, %v374
    %v413 = vunpack.c.l.b16 %v342
    %v414 = vunpack.c.h.b16 %v342
    %v415 = vunpack.c.l.b16 %v343
    %v416 = vunpack.c.h.b16 %v343
    %v417 = vunpack.c.l.b16 %v344
    %v418 = vunpack.c.h.b16 %v344
    %v419 = vunpack.c.l.b16 %v345
    %v420 = vunpack.c.h.b16 %v345
    %v421 = vunpack.c.l.b16 %v346
    %v422 = vunpack.c.h.b16 %v346
    %v423 = vunpack.c.l.b16 %v347
    %v424 = vunpack.c.h.b16 %v347
    %v425 = vunpack.c.l.b16 %v348
    %v426 = vunpack.c.h.b16 %v348
    %v427 = vunpack.c.l.b16 %v349
    %v428 = vunpack.c.h.b16 %v349
    %v429 = vunpack.c.l.b16 %v350
    %v430 = vunpack.c.h.b16 %v350
    %v431 = vunpack.c.l.b16 %v351
    %v432 = vunpack.c.h.b16 %v351
    %v433 = vunpack.c.l.b16 %v352
    %v434 = vunpack.c.h.b16 %v352
    %v435 = vunpack.c.l.b16 %v353
    %v436 = vunpack.c.h.b16 %v353
    %v437 = vunpack.c.l.b16 %v354
    %v438 = vunpack.c.h.b16 %v354
    %v439 = vunpack.c.l.b16 %v355
    %v440 = vunpack.c.h.b16 %v355
    %v441 = vunpack.c.l.b16 %v356
    %v442 = vunpack.c.h.b16 %v356
    %v443 = vunpack.c.l.b16 %v357
    %v444 = vunpack.c.h.b16 %v357
    %v445 = vunpack.c.l.b16 %v358
    %v446 = vunpack.c.h.b16 %v358
    %v447 = vunpack.c.l.b16 %v359
    %v448 = vunpack.c.h.b16 %v359
    %v449 = vunpack.c.l.b16 %v360
    %v450 = vunpack.c.h.b16 %v360
    %v451 = vunpack.c.l.b16 %v361
    %v452 = vunpack.c.h.b16 %v361
    %v453 = vunpack.c.l.b16 %v362
    %v454 = vunpack.c.h.b16 %v362
    %v455 = vunpack.c.l.b16 %v363
    %v456 = vunpack.c.h.b16 %v363
    %v457 = vunpack.c.l.b16 %v364
    %v458 = vunpack.c.h.b16 %v364
    %v459 = vunpack.c.l.b16 %v365
    %v460 = vunpack.c.h.b16 %v365
    %v461 = vunpack.c.l.b16 %v366
    %v462 = vunpack.c.h.b16 %v366
    %v463 = vunpack.c.l.b16 %v367
    %v464 = vunpack.c.h.b16 %v367
    %v465 = vunpack.c.l.b16 %v368
    %v466 = vunpack.c.h.b16 %v368
    %v467 = vunpack.c.l.b16 %v369
    %v468 = vunpack.c.h.b16 %v369
    %v469 = vunpack.c.l.b16 %v370
    %v470 = vunpack.c.h.b16 %v370
    %v471 = vunpack.c.l.b16 %v371
    %v472 = vunpack.c.h.b16 %v371
    %v473 = vunpack.c.l.b16 %v372
    %v474 = vunpack.c.h.b16 %v372
    %v475 = vunpack.c.l.b16 %v373
    %v476 = vunpack.c.h.b16 %v373
    %v477 = vpack.c.b16 %v417, %v413
    %v478 = vpack.c.b16 %v418, %v414
    %v479 = vpack.c.b16 %v419, %v415
    %v480 = vpack.c.b16 %v420, %v416
    %v481 = vpack.c.b16 %v425, %v421
    %v482 = vpack.c.b16 %v426, %v422
    %v483 = vpack.c.b16 %v427, %v423
    %v484 = vpack.c.b16 %v428, %v424
    %v485 = vpack.c.b16 %v433, %v429
    %v486 = vpack.c.b16 %v434, %v430
    %v487 = vpack.c.b16 %v435, %v431
    %v488 = vpack.c.b16 %v436, %v432
    %v489 = vpack.c.b16 %v441, %v437
    %v490 = vpack.c.b16 %v442, %v438
    %v491 = vpack.c.b16 %v443, %v439
    %v492 = vpack.c.b16 %v444, %v440
    %v493 = vpack.c.b16 %v449, %v445
    %v494 = vpack.c.b16 %v450, %v446
    %v495 = vpack.c.b16 %v451, %v447
    %v496 = vpack.c.b16 %v452, %v448
    %v497 = vpack.c.b16 %v457, %v453
    %v498 = vpack.c.b16 %v458, %v454
    %v499 = vpack.c.b16 %v459, %v455
    %v500 = vpack.c.b16 %v460, %v456
    %v501 = vpack.c.b16 %v465, %v461
    %v502 = vpack.c.b16 %v466, %v462
    %v503 = vpack.c.b16 %v467, %v463
    %v504 = vpack.c.b16 %v468, %v464
    %v505 = vpack.c.b16 %v473, %v469
    %v506 = vpack.c.b16 %v474, %v470
    %v507 = vpack.c.b16 %v475, %v471
    %v508 = vpack.c.b16 %v476, %v472
    %541 = vmatprep.subr.bf16.mxu0 %v506
    %542 = vmatpush1.bf16.msra.mxu0 %v505
    %543 = vmatprep.subr.bf16.mxu0 %v502
    %544 = vmatpush1.bf16.msra.mxu0 %v501
    %545 = vmatprep.subr.bf16.mxu0 %v498
    %546 = vmatpush1.bf16.msra.mxu0 %v497
    %547 = vmatprep.subr.bf16.mxu0 %v494
    %548 = vmatpush1.bf16.msra.mxu0 %v493
    %549 = vmatprep.subr.bf16.mxu0 %v490
    %550 = vmatpush1.bf16.msra.mxu0 %v489
    %551 = vmatprep.subr.bf16.mxu0 %v486
    %552 = vmatpush1.bf16.msra.mxu0 %v485
    %553 = vmatprep.subr.bf16.mxu0 %v482
    %554 = vmatpush1.bf16.msra.mxu0 %v481
    %555 = vmatprep.subr.bf16.mxu0 %v478
    %556 = vmatpush1.bf16.msra.mxu0 %v477
    %557 = vmatprep.subr.bf16.mxu0 0
    %558 = vmatpush2.bf16.msra.mxu0 0
    %559 = vmatprep.subr.bf16.mxu0 0
    %560 = vmatpush2.bf16.msra.mxu0 0
    %561 = vmatprep.subr.bf16.mxu0 0
    %562 = vmatpush2.bf16.msra.mxu0 0
    %563 = vmatprep.subr.bf16.mxu0 0
    %564 = vmatpush2.bf16.msra.mxu0 0
    %565 = vmatprep.subr.bf16.mxu0 0
    %566 = vmatpush2.bf16.msra.mxu0 0
    %567 = vmatprep.subr.bf16.mxu0 0
    %568 = vmatpush2.bf16.msra.mxu0 0
    %569 = vmatprep.subr.bf16.mxu0 0
    %570 = vmatpush2.bf16.msra.mxu0 0
    %571 = vmatprep.subr.bf16.mxu0 0
    %572 = vmatpush2.bf16.msra.mxu0 0
    %573 = vmatprep.mubr.bf16.mxu0 0
    %574 = vmatmul.mubr.bf16.gmra.mxu0 %v380
    %v575 = vpop.f32.mrf.mxu0
    %v576 = vadd.f32 0.0, %v575
    %v577 = vpop.f32.mrf.mxu0
    %v578 = vadd.f32 0.0, %v577
    %v579 = vpop.f32.mrf.mxu0
    %v580 = vpop.f32.mrf.mxu0
    %581 = vdwg.mxu0
    %582 = vmatprep.subr.bf16.mxu0 %v508
    %583 = vmatpush1.bf16.msra.mxu0 %v507
    %584 = vmatprep.subr.bf16.mxu0 %v504
    %585 = vmatpush1.bf16.msra.mxu0 %v503
    %586 = vmatprep.subr.bf16.mxu0 %v500
    %587 = vmatpush1.bf16.msra.mxu0 %v499
    %588 = vmatprep.subr.bf16.mxu0 %v496
    %589 = vmatpush1.bf16.msra.mxu0 %v495
    %590 = vmatprep.subr.bf16.mxu0 %v492
    %591 = vmatpush1.bf16.msra.mxu0 %v491
    %592 = vmatprep.subr.bf16.mxu0 %v488
    %593 = vmatpush1.bf16.msra.mxu0 %v487
    %594 = vmatprep.subr.bf16.mxu0 %v484
    %595 = vmatpush1.bf16.msra.mxu0 %v483
    %596 = vmatprep.subr.bf16.mxu0 %v480
    %597 = vmatpush1.bf16.msra.mxu0 %v479
    %598 = vmatprep.subr.bf16.mxu0 0
    %599 = vmatpush2.bf16.msra.mxu0 0
    %600 = vmatprep.subr.bf16.mxu0 0
    %601 = vmatpush2.bf16.msra.mxu0 0
    %602 = vmatprep.subr.bf16.mxu0 0
    %603 = vmatpush2.bf16.msra.mxu0 0
    %604 = vmatprep.subr.bf16.mxu0 0
    %605 = vmatpush2.bf16.msra.mxu0 0
    %606 = vmatprep.subr.bf16.mxu0 0
    %607 = vmatpush2.bf16.msra.mxu0 0
    %608 = vmatprep.subr.bf16.mxu0 0
    %609 = vmatpush2.bf16.msra.mxu0 0
    %610 = vmatprep.subr.bf16.mxu0 0
    %611 = vmatpush2.bf16.msra.mxu0 0
    %612 = vmatprep.subr.bf16.mxu0 0
    %613 = vmatpush2.bf16.msra.mxu0 0
    %614 = vmatprep.mubr.bf16.mxu0 0
    %615 = vmatmul.mubr.bf16.gmra.mxu0 %v380
    %v616 = vpop.f32.mrf.mxu0
    %v617 = vadd.f32 0.0, %v616
    %v618 = vpop.f32.mrf.mxu0
    %v619 = vadd.f32 0.0, %v618
    %v620 = vpop.f32.mrf.mxu0
    %v621 = vpop.f32.mrf.mxu0
    %622 = vdwg.mxu0
    %v623 = vadd.f32 %v376, %v576
    %v624 = vadd.f32 %v377, %v578
    %v625 = vadd.f32 %v378, %v617
    %v626 = vadd.f32 %v379, %v619
    %v627 = vxor.u32 %v623, 2147483648
    %v628 = vmul.f32 %v627, 1.442695
    %v629 = vpow.pop %v628
    %v630 = vadd.f32 %v629, 1.0
    %v631 = vrcp.pop %v630
    %v632 = vmul.f32 1.0, %v631
    %v633 = vxor.u32 %v624, 2147483648
    %v634 = vmul.f32 %v633, 1.442695
    %v635 = vpow.pop %v634
    %v636 = vadd.f32 %v635, 1.0
    %v637 = vrcp.pop %v636
    %v638 = vmul.f32 1.0, %v637
    %v639 = vtanh.pop %v625
    %v640 = vxor.u32 %v626, 2147483648
    %v641 = vmul.f32 %v640, 1.442695
    %v642 = vpow.pop %v641
    %v643 = vadd.f32 %v642, 1.0
    %v644 = vrcp.pop %v643
    %v645 = vmul.f32 1.0, %v644
    %v646 = vmul.f32 %v638, %v375
    %v647 = vmul.f32 %v632, %v639
    %v648 = vadd.f32 %v646, %v647
    %v649 = vtanh.pop %v648
    %v650 = vmul.f32 %v645, %v649
    %651 = vst [vmem:[#allocation8] sm:$0xff] %v650
    %v652 = vld [vmem:[#allocation2 + $0x20] sm:$0xff]
    %v653 = vld [vmem:[#allocation2 + $0x28] sm:$0xff]
    %v654 = vld [vmem:[#allocation2 + $0x30] sm:$0xff]
    %v655 = vld [vmem:[#allocation2 + $0x38] sm:$0xff]
    %v656 = vpack.c.bf16 %v650, %v650
    %657 = vmatprep.subr.bf16.mxu0 %v506
    %658 = vmatpush1.bf16.msra.mxu0 %v505
    %659 = vmatprep.subr.bf16.mxu0 %v502
    %660 = vmatpush1.bf16.msra.mxu0 %v501
    %661 = vmatprep.subr.bf16.mxu0 %v498
    %662 = vmatpush1.bf16.msra.mxu0 %v497
    %663 = vmatprep.subr.bf16.mxu0 %v494
    %664 = vmatpush1.bf16.msra.mxu0 %v493
    %665 = vmatprep.subr.bf16.mxu0 %v490
    %666 = vmatpush1.bf16.msra.mxu0 %v489
    %667 = vmatprep.subr.bf16.mxu0 %v486
    %668 = vmatpush1.bf16.msra.mxu0 %v485
    %669 = vmatprep.subr.bf16.mxu0 %v482
    %670 = vmatpush1.bf16.msra.mxu0 %v481
    %671 = vmatprep.subr.bf16.mxu0 %v478
    %672 = vmatpush1.bf16.msra.mxu0 %v477
    %673 = vmatprep.subr.bf16.mxu0 0
    %674 = vmatpush2.bf16.msra.mxu0 0
    %675 = vmatprep.subr.bf16.mxu0 0
    %676 = vmatpush2.bf16.msra.mxu0 0
    %677 = vmatprep.subr.bf16.mxu0 0
    %678 = vmatpush2.bf16.msra.mxu0 0
    %679 = vmatprep.subr.bf16.mxu0 0
    %680 = vmatpush2.bf16.msra.mxu0 0
    %681 = vmatprep.subr.bf16.mxu0 0
    %682 = vmatpush2.bf16.msra.mxu0 0
    %683 = vmatprep.subr.bf16.mxu0 0
    %684 = vmatpush2.bf16.msra.mxu0 0
    %685 = vmatprep.subr.bf16.mxu0 0
    %686 = vmatpush2.bf16.msra.mxu0 0
    %687 = vmatprep.subr.bf16.mxu0 0
    %688 = vmatpush2.bf16.msra.mxu0 0
    %689 = vmatprep.mubr.bf16.mxu0 0
    %690 = vmatmul.mubr.bf16.gmra.mxu0 %v656
    %v691 = vpop.f32.mrf.mxu0
    %v692 = vadd.f32 0.0, %v691
    %v693 = vpop.f32.mrf.mxu0
    %v694 = vadd.f32 0.0, %v693
    %v695 = vpop.f32.mrf.mxu0
    %v696 = vpop.f32.mrf.mxu0
    %697 = vdwg.mxu0
    %698 = vmatprep.subr.bf16.mxu0 %v508
    %699 = vmatpush1.bf16.msra.mxu0 %v507
    %700 = vmatprep.subr.bf16.mxu0 %v504
    %701 = vmatpush1.bf16.msra.mxu0 %v503
    %702 = vmatprep.subr.bf16.mxu0 %v500
    %703 = vmatpush1.bf16.msra.mxu0 %v499
    %704 = vmatprep.subr.bf16.mxu0 %v496
    %705 = vmatpush1.bf16.msra.mxu0 %v495
    %706 = vmatprep.subr.bf16.mxu0 %v492
    %707 = vmatpush1.bf16.msra.mxu0 %v491
    %708 = vmatprep.subr.bf16.mxu0 %v488
    %709 = vmatpush1.bf16.msra.mxu0 %v487
    %710 = vmatprep.subr.bf16.mxu0 %v484
    %711 = vmatpush1.bf16.msra.mxu0 %v483
    %712 = vmatprep.subr.bf16.mxu0 %v480
    %713 = vmatpush1.bf16.msra.mxu0 %v479
    %714 = vmatprep.subr.bf16.mxu0 0
    %715 = vmatpush2.bf16.msra.mxu0 0
    %716 = vmatprep.subr.bf16.mxu0 0
    %717 = vmatpush2.bf16.msra.mxu0 0
    %718 = vmatprep.subr.bf16.mxu0 0
    %719 = vmatpush2.bf16.msra.mxu0 0
    %720 = vmatprep.subr.bf16.mxu0 0
    %721 = vmatpush2.bf16.msra.mxu0 0
    %722 = vmatprep.subr.bf16.mxu0 0
    %723 = vmatpush2.bf16.msra.mxu0 0
    %724 = vmatprep.subr.bf16.mxu0 0
    %725 = vmatpush2.bf16.msra.mxu0 0
    %726 = vmatprep.subr.bf16.mxu0 0
    %727 = vmatpush2.bf16.msra.mxu0 0
    %728 = vmatprep.subr.bf16.mxu0 0
    %729 = vmatpush2.bf16.msra.mxu0 0
    %730 = vmatprep.mubr.bf16.mxu0 0
    %731 = vmatmul.mubr.bf16.gmra.mxu0 %v656
    %v732 = vpop.f32.mrf.mxu0
    %v733 = vadd.f32 0.0, %v732
    %v734 = vpop.f32.mrf.mxu0
    %v735 = vadd.f32 0.0, %v734
    %v736 = vpop.f32.mrf.mxu0
    %v737 = vpop.f32.mrf.mxu0
    %738 = vdwg.mxu0
    %v739 = vadd.f32 %v652, %v692
    %v740 = vadd.f32 %v653, %v694
    %v741 = vadd.f32 %v654, %v733
    %v742 = vadd.f32 %v655, %v735
    %v743 = vxor.u32 %v739, 2147483648
    %v744 = vmul.f32 %v743, 1.442695
    %v745 = vpow.pop %v744
    %v746 = vadd.f32 %v745, 1.0
    %v747 = vrcp.pop %v746
    %v748 = vmul.f32 1.0, %v747
    %v749 = vxor.u32 %v740, 2147483648
    %v750 = vmul.f32 %v749, 1.442695
    %v751 = vpow.pop %v750
    %v752 = vadd.f32 %v751, 1.0
    %v753 = vrcp.pop %v752
    %v754 = vmul.f32 1.0, %v753
    %v755 = vtanh.pop %v741
    %v756 = vxor.u32 %v742, 2147483648
    %v757 = vmul.f32 %v756, 1.442695
    %v758 = vpow.pop %v757
    %v759 = vadd.f32 %v758, 1.0
    %v760 = vrcp.pop %v759
    %v761 = vmul.f32 1.0, %v760
    %v762 = vmul.f32 %v754, %v648
    %v763 = vmul.f32 %v748, %v755
    %v764 = vadd.f32 %v762, %v763
    %v765 = vtanh.pop %v764
    %v766 = vmul.f32 %v761, %v765
    %767 = vst [vmem:[#allocation8 + $0x8] sm:$0xff] %v766
    %v768 = vld [vmem:[#allocation2 + $0x40] sm:$0xff]
    %v769 = vld [vmem:[#allocation2 + $0x48] sm:$0xff]
    %v770 = vld [vmem:[#allocation2 + $0x50] sm:$0xff]
    %v771 = vld [vmem:[#allocation2 + $0x58] sm:$0xff]
    %v772 = vpack.c.bf16 %v766, %v766
    %773 = vmatprep.subr.bf16.mxu0 %v506
    %774 = vmatpush1.bf16.msra.mxu0 %v505
    %775 = vmatprep.subr.bf16.mxu0 %v502
    %776 = vmatpush1.bf16.msra.mxu0 %v501
    %777 = vmatprep.subr.bf16.mxu0 %v498
    %778 = vmatpush1.bf16.msra.mxu0 %v497
    %779 = vmatprep.subr.bf16.mxu0 %v494
    %780 = vmatpush1.bf16.msra.mxu0 %v493
    %781 = vmatprep.subr.bf16.mxu0 %v490
    %782 = vmatpush1.bf16.msra.mxu0 %v489
    %783 = vmatprep.subr.bf16.mxu0 %v486
    %784 = vmatpush1.bf16.msra.mxu0 %v485
    %785 = vmatprep.subr.bf16.mxu0 %v482
    %786 = vmatpush1.bf16.msra.mxu0 %v481
    %787 = vmatprep.subr.bf16.mxu0 %v478
    %788 = vmatpush1.bf16.msra.mxu0 %v477
    %789 = vmatprep.subr.bf16.mxu0 0
    %790 = vmatpush2.bf16.msra.mxu0 0
    %791 = vmatprep.subr.bf16.mxu0 0
    %792 = vmatpush2.bf16.msra.mxu0 0
    %793 = vmatprep.subr.bf16.mxu0 0
    %794 = vmatpush2.bf16.msra.mxu0 0
    %795 = vmatprep.subr.bf16.mxu0 0
    %796 = vmatpush2.bf16.msra.mxu0 0
    %797 = vmatprep.subr.bf16.mxu0 0
    %798 = vmatpush2.bf16.msra.mxu0 0
    %799 = vmatprep.subr.bf16.mxu0 0
    %800 = vmatpush2.bf16.msra.mxu0 0
    %801 = vmatprep.subr.bf16.mxu0 0
    %802 = vmatpush2.bf16.msra.mxu0 0
    %803 = vmatprep.subr.bf16.mxu0 0
    %804 = vmatpush2.bf16.msra.mxu0 0
    %805 = vmatprep.mubr.bf16.mxu0 0
    %806 = vmatmul.mubr.bf16.gmra.mxu0 %v772
    %v807 = vpop.f32.mrf.mxu0
    %v808 = vadd.f32 0.0, %v807
    %v809 = vpop.f32.mrf.mxu0
    %v810 = vadd.f32 0.0, %v809
    %v811 = vpop.f32.mrf.mxu0
    %v812 = vpop.f32.mrf.mxu0
    %813 = vdwg.mxu0
    %814 = vmatprep.subr.bf16.mxu0 %v508
    %815 = vmatpush1.bf16.msra.mxu0 %v507
    %816 = vmatprep.subr.bf16.mxu0 %v504
    %817 = vmatpush1.bf16.msra.mxu0 %v503
    %818 = vmatprep.subr.bf16.mxu0 %v500
    %819 = vmatpush1.bf16.msra.mxu0 %v499
    %820 = vmatprep.subr.bf16.mxu0 %v496
    %821 = vmatpush1.bf16.msra.mxu0 %v495
    %822 = vmatprep.subr.bf16.mxu0 %v492
    %823 = vmatpush1.bf16.msra.mxu0 %v491
    %824 = vmatprep.subr.bf16.mxu0 %v488
    %825 = vmatpush1.bf16.msra.mxu0 %v487
    %826 = vmatprep.subr.bf16.mxu0 %v484
    %827 = vmatpush1.bf16.msra.mxu0 %v483
    %828 = vmatprep.subr.bf16.mxu0 %v480
    %829 = vmatpush1.bf16.msra.mxu0 %v479
    %830 = vmatprep.subr.bf16.mxu0 0
    %831 = vmatpush2.bf16.msra.mxu0 0
    %832 = vmatprep.subr.bf16.mxu0 0
    %833 = vmatpush2.bf16.msra.mxu0 0
    %834 = vmatprep.subr.bf16.mxu0 0
    %835 = vmatpush2.bf16.msra.mxu0 0
    %836 = vmatprep.subr.bf16.mxu0 0
    %837 = vmatpush2.bf16.msra.mxu0 0
    %838 = vmatprep.subr.bf16.mxu0 0
    %839 = vmatpush2.bf16.msra.mxu0 0
    %840 = vmatprep.subr.bf16.mxu0 0
    %841 = vmatpush2.bf16.msra.mxu0 0
    %842 = vmatprep.subr.bf16.mxu0 0
    %843 = vmatpush2.bf16.msra.mxu0 0
    %844 = vmatprep.subr.bf16.mxu0 0
    %845 = vmatpush2.bf16.msra.mxu0 0
    %846 = vmatprep.mubr.bf16.mxu0 0
    %847 = vmatmul.mubr.bf16.gmra.mxu0 %v772
    %v848 = vpop.f32.mrf.mxu0
    %v849 = vadd.f32 0.0, %v848
    %v850 = vpop.f32.mrf.mxu0
    %v851 = vadd.f32 0.0, %v850
    %v852 = vpop.f32.mrf.mxu0
    %v853 = vpop.f32.mrf.mxu0
    %854 = vdwg.mxu0
    %v855 = vadd.f32 %v768, %v808
    %v856 = vadd.f32 %v769, %v810
    %v857 = vadd.f32 %v770, %v849
    %v858 = vadd.f32 %v771, %v851
    %v859 = vxor.u32 %v855, 2147483648
    %v860 = vmul.f32 %v859, 1.442695
    %v861 = vpow.pop %v860
    %v862 = vadd.f32 %v861, 1.0
    %v863 = vrcp.pop %v862
    %v864 = vmul.f32 1.0, %v863
    %v865 = vxor.u32 %v856, 2147483648
    %v866 = vmul.f32 %v865, 1.442695
    %v867 = vpow.pop %v866
    %v868 = vadd.f32 %v867, 1.0
    %v869 = vrcp.pop %v868
    %v870 = vmul.f32 1.0, %v869
    %v871 = vtanh.pop %v857
    %v872 = vxor.u32 %v858, 2147483648
    %v873 = vmul.f32 %v872, 1.442695
    %v874 = vpow.pop %v873
    %v875 = vadd.f32 %v874, 1.0
    %v876 = vrcp.pop %v875
    %v877 = vmul.f32 1.0, %v876
    %v878 = vmul.f32 %v870, %v764
    %v879 = vmul.f32 %v864, %v871
    %v880 = vadd.f32 %v878, %v879
    %v881 = vtanh.pop %v880
    %v882 = vmul.f32 %v877, %v881
    %883 = vst [vmem:[#allocation8 + $0x10] sm:$0xff] %v882
    %v884 = vld [vmem:[#allocation2 + $0x60] sm:$0xff]
    %v885 = vld [vmem:[#allocation2 + $0x68] sm:$0xff]
    %v886 = vld [vmem:[#allocation2 + $0x70] sm:$0xff]
    %v887 = vld [vmem:[#allocation2 + $0x78] sm:$0xff]
    %v888 = vpack.c.bf16 %v882, %v882
    %889 = vmatprep.subr.bf16.mxu0 %v506
    %890 = vmatpush1.bf16.msra.mxu0 %v505
    %891 = vmatprep.subr.bf16.mxu0 %v502
    %892 = vmatpush1.bf16.msra.mxu0 %v501
    %893 = vmatprep.subr.bf16.mxu0 %v498
    %894 = vmatpush1.bf16.msra.mxu0 %v497
    %895 = vmatprep.subr.bf16.mxu0 %v494
    %896 = vmatpush1.bf16.msra.mxu0 %v493
    %897 = vmatprep.subr.bf16.mxu0 %v490
    %898 = vmatpush1.bf16.msra.mxu0 %v489
    %899 = vmatprep.subr.bf16.mxu0 %v486
    %900 = vmatpush1.bf16.msra.mxu0 %v485
    %901 = vmatprep.subr.bf16.mxu0 %v482
    %902 = vmatpush1.bf16.msra.mxu0 %v481
    %903 = vmatprep.subr.bf16.mxu0 %v478
    %904 = vmatpush1.bf16.msra.mxu0 %v477
    %905 = vmatprep.subr.bf16.mxu0 0
    %906 = vmatpush2.bf16.msra.mxu0 0
    %907 = vmatprep.subr.bf16.mxu0 0
    %908 = vmatpush2.bf16.msra.mxu0 0
    %909 = vmatprep.subr.bf16.mxu0 0
    %910 = vmatpush2.bf16.msra.mxu0 0
    %911 = vmatprep.subr.bf16.mxu0 0
    %912 = vmatpush2.bf16.msra.mxu0 0
    %913 = vmatprep.subr.bf16.mxu0 0
    %914 = vmatpush2.bf16.msra.mxu0 0
    %915 = vmatprep.subr.bf16.mxu0 0
    %916 = vmatpush2.bf16.msra.mxu0 0
    %917 = vmatprep.subr.bf16.mxu0 0
    %918 = vmatpush2.bf16.msra.mxu0 0
    %919 = vmatprep.subr.bf16.mxu0 0
    %920 = vmatpush2.bf16.msra.mxu0 0
    %921 = vmatprep.mubr.bf16.mxu0 0
    %922 = vmatmul.mubr.bf16.gmra.mxu0 %v888
    %v923 = vpop.f32.mrf.mxu0
    %v924 = vadd.f32 0.0, %v923
    %v925 = vpop.f32.mrf.mxu0
    %v926 = vadd.f32 0.0, %v925
    %v927 = vpop.f32.mrf.mxu0
    %v928 = vpop.f32.mrf.mxu0
    %929 = vdwg.mxu0
    %930 = vmatprep.subr.bf16.mxu0 %v508
    %931 = vmatpush1.bf16.msra.mxu0 %v507
    %932 = vmatprep.subr.bf16.mxu0 %v504
    %933 = vmatpush1.bf16.msra.mxu0 %v503
    %934 = vmatprep.subr.bf16.mxu0 %v500
    %935 = vmatpush1.bf16.msra.mxu0 %v499
    %936 = vmatprep.subr.bf16.mxu0 %v496
    %937 = vmatpush1.bf16.msra.mxu0 %v495
    %938 = vmatprep.subr.bf16.mxu0 %v492
    %939 = vmatpush1.bf16.msra.mxu0 %v491
    %940 = vmatprep.subr.bf16.mxu0 %v488
    %941 = vmatpush1.bf16.msra.mxu0 %v487
    %942 = vmatprep.subr.bf16.mxu0 %v484
    %943 = vmatpush1.bf16.msra.mxu0 %v483
    %944 = vmatprep.subr.bf16.mxu0 %v480
    %945 = vmatpush1.bf16.msra.mxu0 %v479
    %946 = vmatprep.subr.bf16.mxu0 0
    %947 = vmatpush2.bf16.msra.mxu0 0
    %948 = vmatprep.subr.bf16.mxu0 0
    %949 = vmatpush2.bf16.msra.mxu0 0
    %950 = vmatprep.subr.bf16.mxu0 0
    %951 = vmatpush2.bf16.msra.mxu0 0
    %952 = vmatprep.subr.bf16.mxu0 0
    %953 = vmatpush2.bf16.msra.mxu0 0
    %954 = vmatprep.subr.bf16.mxu0 0
    %955 = vmatpush2.bf16.msra.mxu0 0
    %956 = vmatprep.subr.bf16.mxu0 0
    %957 = vmatpush2.bf16.msra.mxu0 0
    %958 = vmatprep.subr.bf16.mxu0 0
    %959 = vmatpush2.bf16.msra.mxu0 0
    %960 = vmatprep.subr.bf16.mxu0 0
    %961 = vmatpush2.bf16.msra.mxu0 0
    %962 = vmatprep.mubr.bf16.mxu0 0
    %963 = vmatmul.mubr.bf16.gmra.mxu0 %v888
    %v964 = vpop.f32.mrf.mxu0
    %v965 = vadd.f32 0.0, %v964
    %v966 = vpop.f32.mrf.mxu0
    %v967 = vadd.f32 0.0, %v966
    %v968 = vpop.f32.mrf.mxu0
    %v969 = vpop.f32.mrf.mxu0
    %970 = vdwg.mxu0
    %v971 = vadd.f32 %v884, %v924
    %v972 = vadd.f32 %v885, %v926
    %v973 = vadd.f32 %v886, %v965
    %v974 = vadd.f32 %v887, %v967
    %v975 = vxor.u32 %v971, 2147483648
    %v976 = vmul.f32 %v975, 1.442695
    %v977 = vpow.pop %v976
    %v978 = vadd.f32 %v977, 1.0
    %v979 = vrcp.pop %v978
    %v980 = vmul.f32 1.0, %v979
    %v981 = vxor.u32 %v972, 2147483648
    %v982 = vmul.f32 %v981, 1.442695
    %v983 = vpow.pop %v982
    %v984 = vadd.f32 %v983, 1.0
    %v985 = vrcp.pop %v984
    %v986 = vmul.f32 1.0, %v985
    %v987 = vtanh.pop %v973
    %v988 = vxor.u32 %v974, 2147483648
    %v989 = vmul.f32 %v988, 1.442695
    %v990 = vpow.pop %v989
    %v991 = vadd.f32 %v990, 1.0
    %v992 = vrcp.pop %v991
    %v993 = vmul.f32 1.0, %v992
    %v994 = vmul.f32 %v986, %v880
    %v995 = vmul.f32 %v980, %v987
    %v996 = vadd.f32 %v994, %v995
    %v997 = vtanh.pop %v996
    %v998 = vmul.f32 %v993, %v997
    %999 = vst [vmem:[#allocation8 + $0x18] sm:$0xff] %v998
    %v1000 = vld [vmem:[#allocation2 + $0x80] sm:$0xff]
    %v1001 = vld [vmem:[#allocation2 + $0x88] sm:$0xff]
    %v1002 = vld [vmem:[#allocation2 + $0x90] sm:$0xff]
    %v1003 = vld [vmem:[#allocation2 + $0x98] sm:$0xff]
    %v1004 = vpack.c.bf16 %v998, %v998
    %1005 = vmatprep.subr.bf16.mxu0 %v506
    %1006 = vmatpush1.bf16.msra.mxu0 %v505
    %1007 = vmatprep.subr.bf16.mxu0 %v502
    %1008 = vmatpush1.bf16.msra.mxu0 %v501
    %1009 = vmatprep.subr.bf16.mxu0 %v498
    %1010 = vmatpush1.bf16.msra.mxu0 %v497
    %1011 = vmatprep.subr.bf16.mxu0 %v494
    %1012 = vmatpush1.bf16.msra.mxu0 %v493
    %1013 = vmatprep.subr.bf16.mxu0 %v490
    %1014 = vmatpush1.bf16.msra.mxu0 %v489
    %1015 = vmatprep.subr.bf16.mxu0 %v486
    %1016 = vmatpush1.bf16.msra.mxu0 %v485
    %1017 = vmatprep.subr.bf16.mxu0 %v482
    %1018 = vmatpush1.bf16.msra.mxu0 %v481
    %1019 = vmatprep.subr.bf16.mxu0 %v478
    %1020 = vmatpush1.bf16.msra.mxu0 %v477
    %1021 = vmatprep.subr.bf16.mxu0 0
    %1022 = vmatpush2.bf16.msra.mxu0 0
    %1023 = vmatprep.subr.bf16.mxu0 0
    %1024 = vmatpush2.bf16.msra.mxu0 0
    %1025 = vmatprep.subr.bf16.mxu0 0
    %1026 = vmatpush2.bf16.msra.mxu0 0
    %1027 = vmatprep.subr.bf16.mxu0 0
    %1028 = vmatpush2.bf16.msra.mxu0 0
    %1029 = vmatprep.subr.bf16.mxu0 0
    %1030 = vmatpush2.bf16.msra.mxu0 0
    %1031 = vmatprep.subr.bf16.mxu0 0
    %1032 = vmatpush2.bf16.msra.mxu0 0
    %1033 = vmatprep.subr.bf16.mxu0 0
    %1034 = vmatpush2.bf16.msra.mxu0 0
    %1035 = vmatprep.subr.bf16.mxu0 0
    %1036 = vmatpush2.bf16.msra.mxu0 0
    %1037 = vmatprep.mubr.bf16.mxu0 0
    %1038 = vmatmul.mubr.bf16.gmra.mxu0 %v1004
    %v1039 = vpop.f32.mrf.mxu0
    %v1040 = vadd.f32 0.0, %v1039
    %v1041 = vpop.f32.mrf.mxu0
    %v1042 = vadd.f32 0.0, %v1041
    %v1043 = vpop.f32.mrf.mxu0
    %v1044 = vpop.f32.mrf.mxu0
    %1045 = vdwg.mxu0
    %1046 = vmatprep.subr.bf16.mxu0 %v508
    %1047 = vmatpush1.bf16.msra.mxu0 %v507
    %1048 = vmatprep.subr.bf16.mxu0 %v504
    %1049 = vmatpush1.bf16.msra.mxu0 %v503
    %1050 = vmatprep.subr.bf16.mxu0 %v500
    %1051 = vmatpush1.bf16.msra.mxu0 %v499
    %1052 = vmatprep.subr.bf16.mxu0 %v496
    %1053 = vmatpush1.bf16.msra.mxu0 %v495
    %1054 = vmatprep.subr.bf16.mxu0 %v492
    %1055 = vmatpush1.bf16.msra.mxu0 %v491
    %1056 = vmatprep.subr.bf16.mxu0 %v488
    %1057 = vmatpush1.bf16.msra.mxu0 %v487
    %1058 = vmatprep.subr.bf16.mxu0 %v484
    %1059 = vmatpush1.bf16.msra.mxu0 %v483
    %1060 = vmatprep.subr.bf16.mxu0 %v480
    %1061 = vmatpush1.bf16.msra.mxu0 %v479
    %1062 = vmatprep.subr.bf16.mxu0 0
    %1063 = vmatpush2.bf16.msra.mxu0 0
    %1064 = vmatprep.subr.bf16.mxu0 0
    %1065 = vmatpush2.bf16.msra.mxu0 0
    %1066 = vmatprep.subr.bf16.mxu0 0
    %1067 = vmatpush2.bf16.msra.mxu0 0
    %1068 = vmatprep.subr.bf16.mxu0 0
    %1069 = vmatpush2.bf16.msra.mxu0 0
    %1070 = vmatprep.subr.bf16.mxu0 0
    %1071 = vmatpush2.bf16.msra.mxu0 0
    %1072 = vmatprep.subr.bf16.mxu0 0
    %1073 = vmatpush2.bf16.msra.mxu0 0
    %1074 = vmatprep.subr.bf16.mxu0 0
    %1075 = vmatpush2.bf16.msra.mxu0 0
    %1076 = vmatprep.subr.bf16.mxu0 0
    %1077 = vmatpush2.bf16.msra.mxu0 0
    %1078 = vmatprep.mubr.bf16.mxu0 0
    %1079 = vmatmul.mubr.bf16.gmra.mxu0 %v1004
    %v1080 = vpop.f32.mrf.mxu0
    %v1081 = vadd.f32 0.0, %v1080
    %v1082 = vpop.f32.mrf.mxu0
    %v1083 = vadd.f32 0.0, %v1082
    %v1084 = vpop.f32.mrf.mxu0
    %v1085 = vpop.f32.mrf.mxu0
    %1086 = vdwg.mxu0
    %v1087 = vadd.f32 %v1000, %v1040
    %v1088 = vadd.f32 %v1001, %v1042
    %v1089 = vadd.f32 %v1002, %v1081
    %v1090 = vadd.f32 %v1003, %v1083
    %v1091 = vxor.u32 %v1087, 2147483648
    %v1092 = vmul.f32 %v1091, 1.442695
    %v1093 = vpow.pop %v1092
    %v1094 = vadd.f32 %v1093, 1.0
    %v1095 = vrcp.pop %v1094
    %v1096 = vmul.f32 1.0, %v1095
    %v1097 = vxor.u32 %v1088, 2147483648
    %v1098 = vmul.f32 %v1097, 1.442695
    %v1099 = vpow.pop %v1098
    %v1100 = vadd.f32 %v1099, 1.0
    %v1101 = vrcp.pop %v1100
    %v1102 = vmul.f32 1.0, %v1101
    %v1103 = vtanh.pop %v1089
    %v1104 = vxor.u32 %v1090, 2147483648
    %v1105 = vmul.f32 %v1104, 1.442695
    %v1106 = vpow.pop %v1105
    %v1107 = vadd.f32 %v1106, 1.0
    %v1108 = vrcp.pop %v1107
    %v1109 = vmul.f32 1.0, %v1108
    %v1110 = vmul.f32 %v1102, %v996
    %v1111 = vmul.f32 %v1096, %v1103
    %v1112 = vadd.f32 %v1110, %v1111
    %v1113 = vtanh.pop %v1112
    %v1114 = vmul.f32 %v1109, %v1113
    %1115 = vst [vmem:[#allocation8 + $0x20] sm:$0xff] %v1114
    %v1116 = vld [vmem:[#allocation2 + $0xa0] sm:$0xff]
    %v1117 = vld [vmem:[#allocation2 + $0xa8] sm:$0xff]
    %v1118 = vld [vmem:[#allocation2 + $0xb0] sm:$0xff]
    %v1119 = vld [vmem:[#allocation2 + $0xb8] sm:$0xff]
    %v1120 = vpack.c.bf16 %v1114, %v1114
    %1121 = vmatprep.subr.bf16.mxu0 %v506
    %1122 = vmatpush1.bf16.msra.mxu0 %v505
    %1123 = vmatprep.subr.bf16.mxu0 %v502
    %1124 = vmatpush1.bf16.msra.mxu0 %v501
    %1125 = vmatprep.subr.bf16.mxu0 %v498
    %1126 = vmatpush1.bf16.msra.mxu0 %v497
    %1127 = vmatprep.subr.bf16.mxu0 %v494
    %1128 = vmatpush1.bf16.msra.mxu0 %v493
    %1129 = vmatprep.subr.bf16.mxu0 %v490
    %1130 = vmatpush1.bf16.msra.mxu0 %v489
    %1131 = vmatprep.subr.bf16.mxu0 %v486
    %1132 = vmatpush1.bf16.msra.mxu0 %v485
    %1133 = vmatprep.subr.bf16.mxu0 %v482
    %1134 = vmatpush1.bf16.msra.mxu0 %v481
    %1135 = vmatprep.subr.bf16.mxu0 %v478
    %1136 = vmatpush1.bf16.msra.mxu0 %v477
    %1137 = vmatprep.subr.bf16.mxu0 0
    %1138 = vmatpush2.bf16.msra.mxu0 0
    %1139 = vmatprep.subr.bf16.mxu0 0
    %1140 = vmatpush2.bf16.msra.mxu0 0
    %1141 = vmatprep.subr.bf16.mxu0 0
    %1142 = vmatpush2.bf16.msra.mxu0 0
    %1143 = vmatprep.subr.bf16.mxu0 0
    %1144 = vmatpush2.bf16.msra.mxu0 0
    %1145 = vmatprep.subr.bf16.mxu0 0
    %1146 = vmatpush2.bf16.msra.mxu0 0
    %1147 = vmatprep.subr.bf16.mxu0 0
    %1148 = vmatpush2.bf16.msra.mxu0 0
    %1149 = vmatprep.subr.bf16.mxu0 0
    %1150 = vmatpush2.bf16.msra.mxu0 0
    %1151 = vmatprep.subr.bf16.mxu0 0
    %1152 = vmatpush2.bf16.msra.mxu0 0
    %1153 = vmatprep.mubr.bf16.mxu0 0
    %1154 = vmatmul.mubr.bf16.gmra.mxu0 %v1120
    %v1155 = vpop.f32.mrf.mxu0
    %v1156 = vadd.f32 0.0, %v1155
    %v1157 = vpop.f32.mrf.mxu0
    %v1158 = vadd.f32 0.0, %v1157
    %v1159 = vpop.f32.mrf.mxu0
    %v1160 = vpop.f32.mrf.mxu0
    %1161 = vdwg.mxu0
    %1162 = vmatprep.subr.bf16.mxu0 %v508
    %1163 = vmatpush1.bf16.msra.mxu0 %v507
    %1164 = vmatprep.subr.bf16.mxu0 %v504
    %1165 = vmatpush1.bf16.msra.mxu0 %v503
    %1166 = vmatprep.subr.bf16.mxu0 %v500
    %1167 = vmatpush1.bf16.msra.mxu0 %v499
    %1168 = vmatprep.subr.bf16.mxu0 %v496
    %1169 = vmatpush1.bf16.msra.mxu0 %v495
    %1170 = vmatprep.subr.bf16.mxu0 %v492
    %1171 = vmatpush1.bf16.msra.mxu0 %v491
    %1172 = vmatprep.subr.bf16.mxu0 %v488
    %1173 = vmatpush1.bf16.msra.mxu0 %v487
    %1174 = vmatprep.subr.bf16.mxu0 %v484
    %1175 = vmatpush1.bf16.msra.mxu0 %v483
    %1176 = vmatprep.subr.bf16.mxu0 %v480
    %1177 = vmatpush1.bf16.msra.mxu0 %v479
    %1178 = vmatprep.subr.bf16.mxu0 0
    %1179 = vmatpush2.bf16.msra.mxu0 0
    %1180 = vmatprep.subr.bf16.mxu0 0
    %1181 = vmatpush2.bf16.msra.mxu0 0
    %1182 = vmatprep.subr.bf16.mxu0 0
    %1183 = vmatpush2.bf16.msra.mxu0 0
    %1184 = vmatprep.subr.bf16.mxu0 0
    %1185 = vmatpush2.bf16.msra.mxu0 0
    %1186 = vmatprep.subr.bf16.mxu0 0
    %1187 = vmatpush2.bf16.msra.mxu0 0
    %1188 = vmatprep.subr.bf16.mxu0 0
    %1189 = vmatpush2.bf16.msra.mxu0 0
    %1190 = vmatprep.subr.bf16.mxu0 0
    %1191 = vmatpush2.bf16.msra.mxu0 0
    %1192 = vmatprep.subr.bf16.mxu0 0
    %1193 = vmatpush2.bf16.msra.mxu0 0
    %1194 = vmatprep.mubr.bf16.mxu0 0
    %1195 = vmatmul.mubr.bf16.gmra.mxu0 %v1120
    %v1196 = vpop.f32.mrf.mxu0
    %v1197 = vadd.f32 0.0, %v1196
    %v1198 = vpop.f32.mrf.mxu0
    %v1199 = vadd.f32 0.0, %v1198
    %v1200 = vpop.f32.mrf.mxu0
    %v1201 = vpop.f32.mrf.mxu0
    %1202 = vdwg.mxu0
    %v1203 = vadd.f32 %v1116, %v1156
    %v1204 = vadd.f32 %v1117, %v1158
    %v1205 = vadd.f32 %v1118, %v1197
    %v1206 = vadd.f32 %v1119, %v1199
    %v1207 = vxor.u32 %v1203, 2147483648
    %v1208 = vmul.f32 %v1207, 1.442695
    %v1209 = vpow.pop %v1208
    %v1210 = vadd.f32 %v1209, 1.0
    %v1211 = vrcp.pop %v1210
    %v1212 = vmul.f32 1.0, %v1211
    %v1213 = vxor.u32 %v1204, 2147483648
    %v1214 = vmul.f32 %v1213, 1.442695
    %v1215 = vpow.pop %v1214
    %v1216 = vadd.f32 %v1215, 1.0
    %v1217 = vrcp.pop %v1216
    %v1218 = vmul.f32 1.0, %v1217
    %v1219 = vtanh.pop %v1205
    %v1220 = vxor.u32 %v1206, 2147483648
    %v1221 = vmul.f32 %v1220, 1.442695
    %v1222 = vpow.pop %v1221
    %v1223 = vadd.f32 %v1222, 1.0
    %v1224 = vrcp.pop %v1223
    %v1225 = vmul.f32 1.0, %v1224
    %v1226 = vmul.f32 %v1218, %v1112
    %v1227 = vmul.f32 %v1212, %v1219
    %v1228 = vadd.f32 %v1226, %v1227
    %v1229 = vtanh.pop %v1228
    %v1230 = vmul.f32 %v1225, %v1229
    %1231 = vst [vmem:[#allocation8 + $0x28] sm:$0xff] %v1230
    %v1232 = vld [vmem:[#allocation2 + $0xc0] sm:$0xff]
    %v1233 = vld [vmem:[#allocation2 + $0xc8] sm:$0xff]
    %v1234 = vld [vmem:[#allocation2 + $0xd0] sm:$0xff]
    %v1235 = vld [vmem:[#allocation2 + $0xd8] sm:$0xff]
    %v1236 = vpack.c.bf16 %v1230, %v1230
    %1237 = vmatprep.subr.bf16.mxu0 %v506
    %1238 = vmatpush1.bf16.msra.mxu0 %v505
    %1239 = vmatprep.subr.bf16.mxu0 %v502
    %1240 = vmatpush1.bf16.msra.mxu0 %v501
    %1241 = vmatprep.subr.bf16.mxu0 %v498
    %1242 = vmatpush1.bf16.msra.mxu0 %v497
    %1243 = vmatprep.subr.bf16.mxu0 %v494
    %1244 = vmatpush1.bf16.msra.mxu0 %v493
    %1245 = vmatprep.subr.bf16.mxu0 %v490
    %1246 = vmatpush1.bf16.msra.mxu0 %v489
    %1247 = vmatprep.subr.bf16.mxu0 %v486
    %1248 = vmatpush1.bf16.msra.mxu0 %v485
    %1249 = vmatprep.subr.bf16.mxu0 %v482
    %1250 = vmatpush1.bf16.msra.mxu0 %v481
    %1251 = vmatprep.subr.bf16.mxu0 %v478
    %1252 = vmatpush1.bf16.msra.mxu0 %v477
    %1253 = vmatprep.subr.bf16.mxu0 0
    %1254 = vmatpush2.bf16.msra.mxu0 0
    %1255 = vmatprep.subr.bf16.mxu0 0
    %1256 = vmatpush2.bf16.msra.mxu0 0
    %1257 = vmatprep.subr.bf16.mxu0 0
    %1258 = vmatpush2.bf16.msra.mxu0 0
    %1259 = vmatprep.subr.bf16.mxu0 0
    %1260 = vmatpush2.bf16.msra.mxu0 0
    %1261 = vmatprep.subr.bf16.mxu0 0
    %1262 = vmatpush2.bf16.msra.mxu0 0
    %1263 = vmatprep.subr.bf16.mxu0 0
    %1264 = vmatpush2.bf16.msra.mxu0 0
    %1265 = vmatprep.subr.bf16.mxu0 0
    %1266 = vmatpush2.bf16.msra.mxu0 0
    %1267 = vmatprep.subr.bf16.mxu0 0
    %1268 = vmatpush2.bf16.msra.mxu0 0
    %1269 = vmatprep.mubr.bf16.mxu0 0
    %1270 = vmatmul.mubr.bf16.gmra.mxu0 %v1236
    %v1271 = vpop.f32.mrf.mxu0
    %v1272 = vadd.f32 0.0, %v1271
    %v1273 = vpop.f32.mrf.mxu0
    %v1274 = vadd.f32 0.0, %v1273
    %v1275 = vpop.f32.mrf.mxu0
    %v1276 = vpop.f32.mrf.mxu0
    %1277 = vdwg.mxu0
    %1278 = vmatprep.subr.bf16.mxu0 %v508
    %1279 = vmatpush1.bf16.msra.mxu0 %v507
    %1280 = vmatprep.subr.bf16.mxu0 %v504
    %1281 = vmatpush1.bf16.msra.mxu0 %v503
    %1282 = vmatprep.subr.bf16.mxu0 %v500
    %1283 = vmatpush1.bf16.msra.mxu0 %v499
    %1284 = vmatprep.subr.bf16.mxu0 %v496
    %1285 = vmatpush1.bf16.msra.mxu0 %v495
    %1286 = vmatprep.subr.bf16.mxu0 %v492
    %1287 = vmatpush1.bf16.msra.mxu0 %v491
    %1288 = vmatprep.subr.bf16.mxu0 %v488
    %1289 = vmatpush1.bf16.msra.mxu0 %v487
    %1290 = vmatprep.subr.bf16.mxu0 %v484
    %1291 = vmatpush1.bf16.msra.mxu0 %v483
    %1292 = vmatprep.subr.bf16.mxu0 %v480
    %1293 = vmatpush1.bf16.msra.mxu0 %v479
    %1294 = vmatprep.subr.bf16.mxu0 0
    %1295 = vmatpush2.bf16.msra.mxu0 0
    %1296 = vmatprep.subr.bf16.mxu0 0
    %1297 = vmatpush2.bf16.msra.mxu0 0
    %1298 = vmatprep.subr.bf16.mxu0 0
    %1299 = vmatpush2.bf16.msra.mxu0 0
    %1300 = vmatprep.subr.bf16.mxu0 0
    %1301 = vmatpush2.bf16.msra.mxu0 0
    %1302 = vmatprep.subr.bf16.mxu0 0
    %1303 = vmatpush2.bf16.msra.mxu0 0
    %1304 = vmatprep.subr.bf16.mxu0 0
    %1305 = vmatpush2.bf16.msra.mxu0 0
    %1306 = vmatprep.subr.bf16.mxu0 0
    %1307 = vmatpush2.bf16.msra.mxu0 0
    %1308 = vmatprep.subr.bf16.mxu0 0
    %1309 = vmatpush2.bf16.msra.mxu0 0
    %1310 = vmatprep.mubr.bf16.mxu0 0
    %1311 = vmatmul.mubr.bf16.gmra.mxu0 %v1236
    %v1312 = vpop.f32.mrf.mxu0
    %v1313 = vadd.f32 0.0, %v1312
    %v1314 = vpop.f32.mrf.mxu0
    %v1315 = vadd.f32 0.0, %v1314
    %v1316 = vpop.f32.mrf.mxu0
    %v1317 = vpop.f32.mrf.mxu0
    %1318 = vdwg.mxu0
    %v1319 = vadd.f32 %v1232, %v1272
    %v1320 = vadd.f32 %v1233, %v1274
    %v1321 = vadd.f32 %v1234, %v1313
    %v1322 = vadd.f32 %v1235, %v1315
    %v1323 = vxor.u32 %v1319, 2147483648
    %v1324 = vmul.f32 %v1323, 1.442695
    %v1325 = vpow.pop %v1324
    %v1326 = vadd.f32 %v1325, 1.0
    %v1327 = vrcp.pop %v1326
    %v1328 = vmul.f32 1.0, %v1327
    %v1329 = vxor.u32 %v1320, 2147483648
    %v1330 = vmul.f32 %v1329, 1.442695
    %v1331 = vpow.pop %v1330
    %v1332 = vadd.f32 %v1331, 1.0
    %v1333 = vrcp.pop %v1332
    %v1334 = vmul.f32 1.0, %v1333
    %v1335 = vtanh.pop %v1321
    %v1336 = vxor.u32 %v1322, 2147483648
    %v1337 = vmul.f32 %v1336, 1.442695
    %v1338 = vpow.pop %v1337
    %v1339 = vadd.f32 %v1338, 1.0
    %v1340 = vrcp.pop %v1339
    %v1341 = vmul.f32 1.0, %v1340
    %v1342 = vmul.f32 %v1334, %v1228
    %v1343 = vmul.f32 %v1328, %v1335
    %v1344 = vadd.f32 %v1342, %v1343
    %v1345 = vtanh.pop %v1344
    %v1346 = vmul.f32 %v1341, %v1345
    %1347 = vst [vmem:[#allocation8 + $0x30] sm:$0xff] %v1346
    %v1348 = vld [vmem:[#allocation2 + $0xe0] sm:$0xff]
    %v1349 = vld [vmem:[#allocation2 + $0xe8] sm:$0xff]
    %v1350 = vld [vmem:[#allocation2 + $0xf0] sm:$0xff]
    %v1351 = vld [vmem:[#allocation2 + $0xf8] sm:$0xff]
    %v1352 = vpack.c.bf16 %v1346, %v1346
    %1353 = vmatprep.subr.bf16.mxu0 %v506
    %1354 = vmatpush1.bf16.msra.mxu0 %v505
    %1355 = vmatprep.subr.bf16.mxu0 %v502
    %1356 = vmatpush1.bf16.msra.mxu0 %v501
    %1357 = vmatprep.subr.bf16.mxu0 %v498
    %1358 = vmatpush1.bf16.msra.mxu0 %v497
    %1359 = vmatprep.subr.bf16.mxu0 %v494
    %1360 = vmatpush1.bf16.msra.mxu0 %v493
    %1361 = vmatprep.subr.bf16.mxu0 %v490
    %1362 = vmatpush1.bf16.msra.mxu0 %v489
    %1363 = vmatprep.subr.bf16.mxu0 %v486
    %1364 = vmatpush1.bf16.msra.mxu0 %v485
    %1365 = vmatprep.subr.bf16.mxu0 %v482
    %1366 = vmatpush1.bf16.msra.mxu0 %v481
    %1367 = vmatprep.subr.bf16.mxu0 %v478
    %1368 = vmatpush1.bf16.msra.mxu0 %v477
    %1369 = vmatprep.subr.bf16.mxu0 0
    %1370 = vmatpush2.bf16.msra.mxu0 0
    %1371 = vmatprep.subr.bf16.mxu0 0
    %1372 = vmatpush2.bf16.msra.mxu0 0
    %1373 = vmatprep.subr.bf16.mxu0 0
    %1374 = vmatpush2.bf16.msra.mxu0 0
    %1375 = vmatprep.subr.bf16.mxu0 0
    %1376 = vmatpush2.bf16.msra.mxu0 0
    %1377 = vmatprep.subr.bf16.mxu0 0
    %1378 = vmatpush2.bf16.msra.mxu0 0
    %1379 = vmatprep.subr.bf16.mxu0 0
    %1380 = vmatpush2.bf16.msra.mxu0 0
    %1381 = vmatprep.subr.bf16.mxu0 0
    %1382 = vmatpush2.bf16.msra.mxu0 0
    %1383 = vmatprep.subr.bf16.mxu0 0
    %1384 = vmatpush2.bf16.msra.mxu0 0
    %1385 = vmatprep.mubr.bf16.mxu0 0
    %1386 = vmatmul.mubr.bf16.gmra.mxu0 %v1352
    %v1387 = vpop.f32.mrf.mxu0
    %v1388 = vadd.f32 0.0, %v1387
    %v1389 = vpop.f32.mrf.mxu0
    %v1390 = vadd.f32 0.0, %v1389
    %v1391 = vpop.f32.mrf.mxu0
    %v1392 = vpop.f32.mrf.mxu0
    %1393 = vdwg.mxu0
    %1394 = vmatprep.subr.bf16.mxu0 %v508
    %1395 = vmatpush1.bf16.msra.mxu0 %v507
    %1396 = vmatprep.subr.bf16.mxu0 %v504
    %1397 = vmatpush1.bf16.msra.mxu0 %v503
    %1398 = vmatprep.subr.bf16.mxu0 %v500
    %1399 = vmatpush1.bf16.msra.mxu0 %v499
    %1400 = vmatprep.subr.bf16.mxu0 %v496
    %1401 = vmatpush1.bf16.msra.mxu0 %v495
    %1402 = vmatprep.subr.bf16.mxu0 %v492
    %1403 = vmatpush1.bf16.msra.mxu0 %v491
    %1404 = vmatprep.subr.bf16.mxu0 %v488
    %1405 = vmatpush1.bf16.msra.mxu0 %v487
    %1406 = vmatprep.subr.bf16.mxu0 %v484
    %1407 = vmatpush1.bf16.msra.mxu0 %v483
    %1408 = vmatprep.subr.bf16.mxu0 %v480
    %1409 = vmatpush1.bf16.msra.mxu0 %v479
    %1410 = vmatprep.subr.bf16.mxu0 0
    %1411 = vmatpush2.bf16.msra.mxu0 0
    %1412 = vmatprep.subr.bf16.mxu0 0
    %1413 = vmatpush2.bf16.msra.mxu0 0
    %1414 = vmatprep.subr.bf16.mxu0 0
    %1415 = vmatpush2.bf16.msra.mxu0 0
    %1416 = vmatprep.subr.bf16.mxu0 0
    %1417 = vmatpush2.bf16.msra.mxu0 0
    %1418 = vmatprep.subr.bf16.mxu0 0
    %1419 = vmatpush2.bf16.msra.mxu0 0
    %1420 = vmatprep.subr.bf16.mxu0 0
    %1421 = vmatpush2.bf16.msra.mxu0 0
    %1422 = vmatprep.subr.bf16.mxu0 0
    %1423 = vmatpush2.bf16.msra.mxu0 0
    %1424 = vmatprep.subr.bf16.mxu0 0
    %1425 = vmatpush2.bf16.msra.mxu0 0
    %1426 = vmatprep.mubr.bf16.mxu0 0
    %1427 = vmatmul.mubr.bf16.gmra.mxu0 %v1352
    %v1428 = vpop.f32.mrf.mxu0
    %v1429 = vadd.f32 0.0, %v1428
    %v1430 = vpop.f32.mrf.mxu0
    %v1431 = vadd.f32 0.0, %v1430
    %v1432 = vpop.f32.mrf.mxu0
    %v1433 = vpop.f32.mrf.mxu0
    %1434 = vdwg.mxu0
    %v1435 = vadd.f32 %v1348, %v1388
    %v1436 = vadd.f32 %v1349, %v1390
    %v1437 = vadd.f32 %v1350, %v1429
    %v1438 = vadd.f32 %v1351, %v1431
    %v1439 = vxor.u32 %v1435, 2147483648
    %v1440 = vmul.f32 %v1439, 1.442695
    %v1441 = vpow.pop %v1440
    %v1442 = vadd.f32 %v1441, 1.0
    %v1443 = vrcp.pop %v1442
    %v1444 = vmul.f32 1.0, %v1443
    %v1445 = vxor.u32 %v1436, 2147483648
    %v1446 = vmul.f32 %v1445, 1.442695
    %v1447 = vpow.pop %v1446
    %v1448 = vadd.f32 %v1447, 1.0
    %v1449 = vrcp.pop %v1448
    %v1450 = vmul.f32 1.0, %v1449
    %v1451 = vtanh.pop %v1437
    %v1452 = vxor.u32 %v1438, 2147483648
    %v1453 = vmul.f32 %v1452, 1.442695
    %v1454 = vpow.pop %v1453
    %v1455 = vadd.f32 %v1454, 1.0
    %v1456 = vrcp.pop %v1455
    %v1457 = vmul.f32 1.0, %v1456
    %v1458 = vmul.f32 %v1450, %v1344
    %v1459 = vmul.f32 %v1444, %v1451
    %v1460 = vadd.f32 %v1458, %v1459
    %v1461 = vtanh.pop %v1460
    %v1462 = vmul.f32 %v1457, %v1461
    %1463 = vst [vmem:[#allocation8 + $0x38] sm:$0xff] %v1462
    // Predicated region
    $region34: #{tpu_custom_call.1} parent=1 // pred_check
      _
    $region35: #{tpu_custom_call.1} parent=1 // pred_check_branch
      %1465 = sbr.rel (0) target = $region37
    $region36: #{tpu_custom_call.1} parent=1 // pred_region
      %s1467 = ssub.s32 1024, 1024
      %1468 = vsyncadd [#allocation5], %s1467
      %s1469 = sshll.u32 [#allocation8], 4
      %s1470 = int_to_ptr.vmem [resolvable:$true] %s1469
      %1475 = dma.vmem_to_hbm [thread:$0]  %s1470, 1024, %s6, [#allocation5], 128, 128, 8
    $region37: #{tpu_custom_call.1} parent=1 // pred_fallthru
      _
    // Predicated region
    $region38: #{tpu_custom_call.1} parent=1 // pred_check
      _
    $region39: #{tpu_custom_call.1} parent=1 // pred_check_branch
      %1477 = sbr.rel (0) target = $region41
    $region40: #{tpu_custom_call.1} parent=1 // pred_region
      %1478 = dma.done [#allocation5], 1024
    $region41: #{tpu_custom_call.1} parent=1 // pred_fallthru
      _
    %1479 = vsyncpa [#allocation4], 1
    %1480 = vsyncpa [#allocation7], 1
    %1481 = vsyncpa [#allocation5], 1

</llo_original>
